<compile_context>
chip_gen: v5e
topology: v5e:2x2
jax: 0.10.0
libtpu: 0.0.40
codegen_flags: <defaults>
</compile_context>

<pallas_src>
from functools import partial

import numpy as np
import jax
import jax.numpy as jnp
from jax.experimental import pallas as pl
from jax.experimental.pallas import tpu as pltpu


def _bilinear_matrix(n_in, n_out):
    """Row-stochastic matrix implementing align_corners=True bilinear resize."""
    U = np.zeros((n_out, n_in), np.float32)
    if n_out == 1:
        U[0, 0] = 1.0
        return U
    for i in range(n_out):
        src = i * (n_in - 1) / (n_out - 1)
        lo = int(np.floor(src))
        hi = min(lo + 1, n_in - 1)
        f = src - lo
        U[i, lo] += 1.0 - f
        U[i, hi] += f
    return U


def _skip_kernel(x_ref, a_ref, sel_ref, bc_ref, g_ref, be_ref, o_ref, *,
                 inv_count):
    # ---- upsample + pad + 3x3 conv: ONE MXU matmul (bf16 in, f32 acc) -------
    conv = jnp.dot(x_ref[...], a_ref[...],
                   preferred_element_type=jnp.float32)          # (N, Cout*HWp)

    # ---- BN stats on the MXU; selector masks the folded-pad junk columns ----
    sum_n = jnp.dot(conv, sel_ref[...],
                    preferred_element_type=jnp.float32)         # (N, Cout)
    sq_n = jnp.dot(conv * conv, sel_ref[...],
                   preferred_element_type=jnp.float32)          # (N, Cout)
    ch_sum = jnp.sum(sum_n, axis=0, keepdims=True)              # (1, Cout)
    ch_sq = jnp.sum(sq_n, axis=0, keepdims=True)
    mean = ch_sum * inv_count
    var = jnp.maximum(ch_sq * inv_count - mean * mean, 0.0)     # clamp >= 0
    scale = g_ref[...] * jax.lax.rsqrt(var + 1e-5)              # (1, Cout)
    shift = be_ref[...] - mean * scale

    # ---- per-channel affine broadcast to lanes via constant matmul ----------
    scale_l = jnp.dot(scale, bc_ref[...],
                      preferred_element_type=jnp.float32)       # (1, L)
    shift_l = jnp.dot(shift, bc_ref[...],
                      preferred_element_type=jnp.float32)       # (1, L)

    # ---- fused scale/shift/ReLU, fully lane-dense store ----------------------
    o_ref[...] = jnp.maximum(conv * scale_l + shift_l, 0.0)


@partial(jax.jit, static_argnums=(5,))
def skip_con_upsamp(x, w, b, gamma, beta, up_scale):
    del b  # conv bias is a no-op through training-mode BatchNorm (mean cancels it)
    N, Cin, H, W = x.shape
    Cout = w.shape[0]
    Hup, Wup = H * up_scale, W * up_scale
    Hp, Wp = Hup + 2, Wup + 2
    HWp = Hup * Wp          # per-(n,co) row width incl. 2 folded-pad junk cols per image row
    K = Cin * H * W         # contraction dim of the fused matmul
    L = Cout * HWp          # output lane width

    # -- trace-time constants: padded bilinear operator + its 9 tap shifts ----
    uh = _bilinear_matrix(H, Hup)
    uw = _bilinear_matrix(W, Wup)
    uh_pad = np.zeros((Hp, H), np.float32)
    uh_pad[1:Hup + 1] = uh
    uw_pad = np.zeros((Wp, W), np.float32)
    uw_pad[1:Wup + 1] = uw
    m_up = np.zeros((H * W, Hp * Wp + 2), np.float32)  # +2 tail keeps tap (2,2) in-bounds
    m_up[:, :Hp * Wp] = np.kron(uh_pad, uw_pad).T
    m_stack = np.stack(
        [m_up[:, (t // 3) * Wp + (t % 3):(t // 3) * Wp + (t % 3) + HWp]
         for t in range(9)], axis=0)                    # (9, H*W, HWp)

    # -- fused operator A (upsample+pad+tap-shift+channel-mix); weights only --
    #    (pure weight preprocessing: cacheable across forward calls)
    w9 = w.reshape(Cout, Cin, 9).astype(jnp.float32)    # [co, c, t], t = ky*3+kx
    a_op = jnp.einsum('oct,thq->choq', w9, jnp.asarray(m_stack),
                      precision=jax.lax.Precision.HIGHEST)
    a_op = a_op.reshape(K, L).astype(jnp.bfloat16)      # bf16 MXU operand

    # -- BN stat selector (masks junk cols) & per-channel broadcast matrix ----
    valid = ((np.arange(HWp) % Wp) < Wup).astype(np.float32)
    sel = np.kron(np.eye(Cout, dtype=np.float32), valid[:, None])              # (L, Cout)
    bcast = np.kron(np.eye(Cout, dtype=np.float32),
                    np.ones((1, HWp), np.float32))                             # (Cout, L)

    # NCHW flatten puts batch on sublanes, (channel, spatial) on lanes: no transpose.
    x_r = x.reshape(N, K).astype(jnp.bfloat16)
    g2 = gamma.reshape(1, Cout).astype(jnp.float32)
    be2 = beta.reshape(1, Cout).astype(jnp.float32)

    kernel = partial(_skip_kernel, inv_count=1.0 / float(N * Hup * Wup))
    vmem = pl.BlockSpec(memory_space=pltpu.MemorySpace.VMEM)

    # Grid-less single program: tiny shapes (launch-latency bound) and BN
    # couples the whole batch, so splitting would need a two-pass stats scheme.
    out2d = pl.pallas_call(
        kernel,
        out_shape=jax.ShapeDtypeStruct((N, L), jnp.float32),
        in_specs=[vmem] * 6,
        out_specs=vmem,
        compiler_params=pltpu.CompilerParams(vmem_limit_bytes=32 * 1024 * 1024),
    )(x_r, a_op, jnp.asarray(sel), jnp.asarray(bcast), g2, be2)

    # crop the folded-pad junk columns and restore NCHW (layout plumbing only)
    return out2d.reshape(N, Cout, Hup, Wp)[:, :, :, :Wup]


def reference(x, w, b, gamma, beta, up_scale):
    N, Cin, H, W = x.shape
    Hup, Wup = H * up_scale, W * up_scale
    uh = jnp.asarray(_bilinear_matrix(H, Hup))   # (Hup, H)
    uw = jnp.asarray(_bilinear_matrix(W, Wup))   # (Wup, W)
    t = jnp.einsum('nchw,pw->nchp', x, uw)
    up = jnp.einsum('oh,nchp->ncop', uh, t)
    conv = jax.lax.conv_general_dilated(
        up, w, window_strides=(1, 1), padding=[(1, 1), (1, 1)],
        dimension_numbers=('NCHW', 'OIHW', 'NCHW'))
    conv = conv + b[None, :, None, None]
    mean = conv.mean(axis=(0, 2, 3), keepdims=True)
    var = conv.var(axis=(0, 2, 3), keepdims=True)   # biased, as in BN training
    y = (conv - mean) * jax.lax.rsqrt(var + 1e-5)
    y = y * gamma[None, :, None, None] + beta[None, :, None, None]
    return jnp.maximum(y, 0.0)


if __name__ == "__main__":
    # in_channels=4, out_channels=4, up_scale=2, input spatial 8x8 -> (2,4,16,16)
    N, Cin, Cout, H, W, up_scale = 2, 4, 4, 8, 8, 2

    key = jax.random.PRNGKey(0)
    kx, kw, kb, kg, kbe = jax.random.split(key, 5)
    x = jax.random.normal(kx, (N, Cin, H, W), jnp.float32)
    w = jax.random.normal(kw, (Cout, Cin, 3, 3), jnp.float32) * 0.1
    b = jax.random.normal(kb, (Cout,), jnp.float32) * 0.1
    gamma = 1.0 + 0.1 * jax.random.normal(kg, (Cout,), jnp.float32)
    beta = 0.1 * jax.random.normal(kbe, (Cout,), jnp.float32)

    out = jax.block_until_ready(skip_con_upsamp(x, w, b, gamma, beta, up_scale))
    ref = jax.block_until_ready(reference(x, w, b, gamma, beta, up_scale))

    assert out.shape == (N, Cout, H * up_scale, W * up_scale)
    max_diff = float(jnp.max(jnp.abs(out - ref)))
    assert jnp.allclose(out, ref, atol=5e-2, rtol=5e-2), (
        "mismatch, max abs diff = %f" % max_diff)

    print("KERNEL_OK")
</pallas_src>

<mosaic_0001>
module attributes {stable_mosaic.version = 11 : i64} {
  func.func @_skip_kernel(%arg0: memref<2x256xbf16, #tpu.memory_space<vmem>>, %arg1: memref<256x1152xbf16, #tpu.memory_space<vmem>>, %arg2: memref<1152x4xf32, #tpu.memory_space<vmem>>, %arg3: memref<4x1152xf32, #tpu.memory_space<vmem>>, %arg4: memref<1x4xf32, #tpu.memory_space<vmem>>, %arg5: memref<1x4xf32, #tpu.memory_space<vmem>>, %arg6: memref<2x1152xf32, #tpu.memory_space<vmem>>) attributes {dimension_semantics = [], scalar_prefetch = 0 : i64, scratch_operands = 0 : i64, tpu.core_type = #tpu.core_type<tc>} {
    %c0 = arith.constant 0 : index
    %c0_0 = arith.constant 0 : index
    %0 = vector.load %arg0[%c0, %c0_0] : memref<2x256xbf16, #tpu.memory_space<vmem>>, vector<2x256xbf16>
    %c0_1 = arith.constant 0 : index
    %c0_2 = arith.constant 0 : index
    %1 = vector.load %arg1[%c0_1, %c0_2] : memref<256x1152xbf16, #tpu.memory_space<vmem>>, vector<256x1152xbf16>
    %cst = arith.constant dense<0.000000e+00> : vector<2x1152xf32>
    %2 = tpu.matmul %0, %1, %cst {dimension_numbers = #tpu.dot_dimension_numbers<[1], [0], [0], [1], [0, 0, 1, 1], [], []>} : vector<2x256xbf16>, vector<256x1152xbf16>, vector<2x1152xf32> -> vector<2x1152xf32>
    %c0_3 = arith.constant 0 : index
    %c0_4 = arith.constant 0 : index
    %3 = vector.load %arg2[%c0_3, %c0_4] : memref<1152x4xf32, #tpu.memory_space<vmem>>, vector<1152x4xf32>
    %cst_5 = arith.constant dense<0.000000e+00> : vector<2x4xf32>
    %4 = tpu.matmul %2, %3, %cst_5 {dimension_numbers = #tpu.dot_dimension_numbers<[1], [0], [0], [1], [0, 0, 1, 1], [], []>} : vector<2x1152xf32>, vector<1152x4xf32>, vector<2x4xf32> -> vector<2x4xf32>
    %5 = arith.mulf %2, %2 : vector<2x1152xf32>
    %c0_6 = arith.constant 0 : index
    %c0_7 = arith.constant 0 : index
    %6 = vector.load %arg2[%c0_6, %c0_7] : memref<1152x4xf32, #tpu.memory_space<vmem>>, vector<1152x4xf32>
    %cst_8 = arith.constant dense<0.000000e+00> : vector<2x4xf32>
    %7 = tpu.matmul %5, %6, %cst_8 {dimension_numbers = #tpu.dot_dimension_numbers<[1], [0], [0], [1], [0, 0, 1, 1], [], []>} : vector<2x1152xf32>, vector<1152x4xf32>, vector<2x4xf32> -> vector<2x4xf32>
    %cst_9 = arith.constant dense<0.000000e+00> : vector<4xf32>
    %8 = vector.multi_reduction <add>, %4, %cst_9 [0] : vector<2x4xf32> to vector<4xf32>
    %9 = vector.shape_cast %8 : vector<4xf32> to vector<1x4xf32>
    %cst_10 = arith.constant dense<0.000000e+00> : vector<4xf32>
    %10 = vector.multi_reduction <add>, %7, %cst_10 [0] : vector<2x4xf32> to vector<4xf32>
    %11 = vector.shape_cast %10 : vector<4xf32> to vector<1x4xf32>
    %cst_11 = arith.constant 0.001953125 : f32
    %12 = vector.broadcast %cst_11 : f32 to vector<1x4xf32>
    %13 = arith.mulf %9, %12 : vector<1x4xf32>
    %cst_12 = arith.constant 0.001953125 : f32
    %14 = vector.broadcast %cst_12 : f32 to vector<1x4xf32>
    %15 = arith.mulf %11, %14 : vector<1x4xf32>
    %16 = arith.mulf %13, %13 : vector<1x4xf32>
    %17 = arith.subf %15, %16 : vector<1x4xf32>
    %cst_13 = arith.constant 0.000000e+00 : f32
    %18 = vector.broadcast %cst_13 : f32 to vector<1x4xf32>
    %19 = arith.maximumf %17, %18 : vector<1x4xf32>
    %c0_14 = arith.constant 0 : index
    %c0_15 = arith.constant 0 : index
    %20 = vector.load %arg4[%c0_14, %c0_15] : memref<1x4xf32, #tpu.memory_space<vmem>>, vector<1x4xf32>
    %cst_16 = arith.constant 9.99999974E-6 : f32
    %21 = vector.broadcast %cst_16 : f32 to vector<1x4xf32>
    %22 = arith.addf %19, %21 : vector<1x4xf32>
    %23 = math.rsqrt %22 : vector<1x4xf32>
    %24 = arith.mulf %20, %23 : vector<1x4xf32>
    %c0_17 = arith.constant 0 : index
    %c0_18 = arith.constant 0 : index
    %25 = vector.load %arg5[%c0_17, %c0_18] : memref<1x4xf32, #tpu.memory_space<vmem>>, vector<1x4xf32>
    %26 = arith.mulf %13, %24 : vector<1x4xf32>
    %27 = arith.subf %25, %26 : vector<1x4xf32>
    %c0_19 = arith.constant 0 : index
    %c0_20 = arith.constant 0 : index
    %28 = vector.load %arg3[%c0_19, %c0_20] : memref<4x1152xf32, #tpu.memory_space<vmem>>, vector<4x1152xf32>
    %cst_21 = arith.constant dense<0.000000e+00> : vector<1x1152xf32>
    %29 = tpu.matmul %24, %28, %cst_21 {dimension_numbers = #tpu.dot_dimension_numbers<[1], [0], [0], [1], [0, 0, 1, 1], [], []>} : vector<1x4xf32>, vector<4x1152xf32>, vector<1x1152xf32> -> vector<1x1152xf32>
    %c0_22 = arith.constant 0 : index
    %c0_23 = arith.constant 0 : index
    %30 = vector.load %arg3[%c0_22, %c0_23] : memref<4x1152xf32, #tpu.memory_space<vmem>>, vector<4x1152xf32>
    %cst_24 = arith.constant dense<0.000000e+00> : vector<1x1152xf32>
    %31 = tpu.matmul %27, %30, %cst_24 {dimension_numbers = #tpu.dot_dimension_numbers<[1], [0], [0], [1], [0, 0, 1, 1], [], []>} : vector<1x4xf32>, vector<4x1152xf32>, vector<1x1152xf32> -> vector<1x1152xf32>
    %32 = vector.broadcast %29 : vector<1x1152xf32> to vector<2x1152xf32>
    %33 = arith.mulf %2, %32 : vector<2x1152xf32>
    %34 = vector.broadcast %31 : vector<1x1152xf32> to vector<2x1152xf32>
    %35 = arith.addf %33, %34 : vector<2x1152xf32>
    %cst_25 = arith.constant 0.000000e+00 : f32
    %36 = vector.broadcast %cst_25 : f32 to vector<2x1152xf32>
    %37 = arith.maximumf %35, %36 : vector<2x1152xf32>
    %c0_26 = arith.constant 0 : index
    %c0_27 = arith.constant 0 : index
    %38 = vector.load %arg6[%c0_26, %c0_27] : memref<2x1152xf32, #tpu.memory_space<vmem>>, vector<2x1152xf32>
    tpu.vector_store %arg6[%c0_26, %c0_27], %37 {strides = array<i32>} : memref<2x1152xf32, #tpu.memory_space<vmem>>, vector<2x1152xf32>,
    return
  }
}

</mosaic_0001>

<llo_original>
// kernel: skip_con_upsamp.1
$region0: #{skip_con_upsamp.1}
  #allocation0 [shape = 'u32[]', space=smem, size = 0x4, offset = 0x4, fixed_abs, tag = 'smem constant byte address 0x4 - core index']
  #allocation1 [shape = 'u32[72,128]{1,0:T(1,128)}', space=vmem, size = 0x9000, scoped, tag = 'internal scratch']
  %s0 = inlined_call_operand.vmem [shape: bf16[2,256], index: 0, kind: input, shape index: {}]
  %s1 = inlined_call_operand.vmem [shape: bf16[256,1152], index: 1, kind: input, shape index: {}]
  %s2 = inlined_call_operand.vmem [shape: f32[1152,4], index: 2, kind: input, shape index: {}]
  %s3 = inlined_call_operand.vmem [shape: f32[4,1152], index: 3, kind: input, shape index: {}]
  %s4 = inlined_call_operand.vmem [shape: f32[1,4], index: 4, kind: input, shape index: {}]
  %s5 = inlined_call_operand.vmem [shape: f32[1,4], index: 5, kind: input, shape index: {}]
  %s6 = inlined_call_operand.vmem [shape: f32[2,1152], index: 6, kind: output, shape index: {}]
  %s7 = sld [smem:[#allocation0]]
  $region34: #{skip_con_upsamp.1} parent=0
    _
  %s9 = ssub.s32 1, %s7
  %s10 = scalar_select 0, %s9, %s7
  // Predicated region
  $region2: #{skip_con_upsamp.1} parent=0 // pred_check
    _
  $region3: #{skip_con_upsamp.1} parent=0 // pred_check_branch
    %12 = sbr.rel (0) target = $region5
  $region4: #{skip_con_upsamp.1} parent=0 // pred_region
    _
  $region5: #{skip_con_upsamp.1} parent=0 // pred_fallthru
    _
  // Predicated region
  $region6: #{skip_con_upsamp.1} parent=0 // pred_check
    _
  $region7: #{skip_con_upsamp.1} parent=0 // pred_check_branch
    %14 = sbr.rel (0) target = $region9
  $region8: #{skip_con_upsamp.1} parent=0 // pred_region
    _
  $region9: #{skip_con_upsamp.1} parent=0 // pred_fallthru
    _
  // Predicated region
  $region10: #{skip_con_upsamp.1} parent=0 // pred_check
    _
  $region11: #{skip_con_upsamp.1} parent=0 // pred_check_branch
    %16 = sbr.rel (0) target = $region13
  $region12: #{skip_con_upsamp.1} parent=0 // pred_region
    _
  $region13: #{skip_con_upsamp.1} parent=0 // pred_fallthru
    _
  // Predicated region
  $region14: #{skip_con_upsamp.1} parent=0 // pred_check
    _
  $region15: #{skip_con_upsamp.1} parent=0 // pred_check_branch
    %18 = sbr.rel (0) target = $region17
  $region16: #{skip_con_upsamp.1} parent=0 // pred_region
    _
  $region17: #{skip_con_upsamp.1} parent=0 // pred_fallthru
    _
  // Predicated region
  $region18: #{skip_con_upsamp.1} parent=0 // pred_check
    _
  $region19: #{skip_con_upsamp.1} parent=0 // pred_check_branch
    %20 = sbr.rel (0) target = $region21
  $region20: #{skip_con_upsamp.1} parent=0 // pred_region
    _
  $region21: #{skip_con_upsamp.1} parent=0 // pred_fallthru
    _
  // Predicated region
  $region22: #{skip_con_upsamp.1} parent=0 // pred_check
    _
  $region23: #{skip_con_upsamp.1} parent=0 // pred_check_branch
    %22 = sbr.rel (0) target = $region25
  $region24: #{skip_con_upsamp.1} parent=0 // pred_region
    _
  $region25: #{skip_con_upsamp.1} parent=0 // pred_fallthru
    _
  %v23 = vld [vmem:[%s0] sm:$0x3]
  %v24 = vld [vmem:[%s1] sm:$0xff]
  %v25 = vld [vmem:[%s1 + $0x8] sm:$0xff]
  %v26 = vld [vmem:[%s1 + $0x10] sm:$0xff]
  %v27 = vld [vmem:[%s1 + $0x18] sm:$0xff]
  %v28 = vld [vmem:[%s1 + $0x20] sm:$0xf]
  %v29 = vld [vmem:[%s1 + $0x24] sm:$0xff]
  %v30 = vld [vmem:[%s1 + $0x2c] sm:$0xff]
  %v31 = vld [vmem:[%s1 + $0x34] sm:$0xff]
  %v32 = vld [vmem:[%s1 + $0x3c] sm:$0xff]
  %v33 = vld [vmem:[%s1 + $0x44] sm:$0xf]
  %v34 = vld [vmem:[%s1 + $0x48] sm:$0xff]
  %v35 = vld [vmem:[%s1 + $0x50] sm:$0xff]
  %v36 = vld [vmem:[%s1 + $0x58] sm:$0xff]
  %v37 = vld [vmem:[%s1 + $0x60] sm:$0xff]
  %v38 = vld [vmem:[%s1 + $0x68] sm:$0xf]
  %v39 = vld [vmem:[%s1 + $0x6c] sm:$0xff]
  %v40 = vld [vmem:[%s1 + $0x74] sm:$0xff]
  %v41 = vld [vmem:[%s1 + $0x7c] sm:$0xff]
  %v42 = vld [vmem:[%s1 + $0x84] sm:$0xff]
  %v43 = vld [vmem:[%s1 + $0x8c] sm:$0xf]
  %v44 = vld [vmem:[%s1 + $0x90] sm:$0xff]
  %v45 = vld [vmem:[%s1 + $0x98] sm:$0xff]
  %v46 = vld [vmem:[%s1 + $0xa0] sm:$0xff]
  %v47 = vld [vmem:[%s1 + $0xa8] sm:$0xff]
  %v48 = vld [vmem:[%s1 + $0xb0] sm:$0xf]
  %v49 = vld [vmem:[%s1 + $0xb4] sm:$0xff]
  %v50 = vld [vmem:[%s1 + $0xbc] sm:$0xff]
  %v51 = vld [vmem:[%s1 + $0xc4] sm:$0xff]
  %v52 = vld [vmem:[%s1 + $0xcc] sm:$0xff]
  %v53 = vld [vmem:[%s1 + $0xd4] sm:$0xf]
  %v54 = vld [vmem:[%s1 + $0xd8] sm:$0xff]
  %v55 = vld [vmem:[%s1 + $0xe0] sm:$0xff]
  %v56 = vld [vmem:[%s1 + $0xe8] sm:$0xff]
  %v57 = vld [vmem:[%s1 + $0xf0] sm:$0xff]
  %v58 = vld [vmem:[%s1 + $0xf8] sm:$0xf]
  %v59 = vld [vmem:[%s1 + $0xfc] sm:$0xff]
  %v60 = vld [vmem:[%s1 + $0x104] sm:$0xff]
  %v61 = vld [vmem:[%s1 + $0x10c] sm:$0xff]
  %v62 = vld [vmem:[%s1 + $0x114] sm:$0xff]
  %v63 = vld [vmem:[%s1 + $0x11c] sm:$0xf]
  %v64 = vld [vmem:[%s1 + $0x120] sm:$0xff]
  %v65 = vld [vmem:[%s1 + $0x128] sm:$0xff]
  %v66 = vld [vmem:[%s1 + $0x130] sm:$0xff]
  %v67 = vld [vmem:[%s1 + $0x138] sm:$0xff]
  %v68 = vld [vmem:[%s1 + $0x140] sm:$0xf]
  %v69 = vld [vmem:[%s1 + $0x144] sm:$0xff]
  %v70 = vld [vmem:[%s1 + $0x14c] sm:$0xff]
  %v71 = vld [vmem:[%s1 + $0x154] sm:$0xff]
  %v72 = vld [vmem:[%s1 + $0x15c] sm:$0xff]
  %v73 = vld [vmem:[%s1 + $0x164] sm:$0xf]
  %v74 = vld [vmem:[%s1 + $0x168] sm:$0xff]
  %v75 = vld [vmem:[%s1 + $0x170] sm:$0xff]
  %v76 = vld [vmem:[%s1 + $0x178] sm:$0xff]
  %v77 = vld [vmem:[%s1 + $0x180] sm:$0xff]
  %v78 = vld [vmem:[%s1 + $0x188] sm:$0xf]
  %v79 = vld [vmem:[%s1 + $0x18c] sm:$0xff]
  %v80 = vld [vmem:[%s1 + $0x194] sm:$0xff]
  %v81 = vld [vmem:[%s1 + $0x19c] sm:$0xff]
  %v82 = vld [vmem:[%s1 + $0x1a4] sm:$0xff]
  %v83 = vld [vmem:[%s1 + $0x1ac] sm:$0xf]
  %v84 = vld [vmem:[%s1 + $0x1b0] sm:$0xff]
  %v85 = vld [vmem:[%s1 + $0x1b8] sm:$0xff]
  %v86 = vld [vmem:[%s1 + $0x1c0] sm:$0xff]
  %v87 = vld [vmem:[%s1 + $0x1c8] sm:$0xff]
  %v88 = vld [vmem:[%s1 + $0x1d0] sm:$0xf]
  %v89 = vld [vmem:[%s1 + $0x1d4] sm:$0xff]
  %v90 = vld [vmem:[%s1 + $0x1dc] sm:$0xff]
  %v91 = vld [vmem:[%s1 + $0x1e4] sm:$0xff]
  %v92 = vld [vmem:[%s1 + $0x1ec] sm:$0xff]
  %v93 = vld [vmem:[%s1 + $0x1f4] sm:$0xf]
  %v94 = vld [vmem:[%s1 + $0x1f8] sm:$0xff]
  %v95 = vld [vmem:[%s1 + $0x200] sm:$0xff]
  %v96 = vld [vmem:[%s1 + $0x208] sm:$0xff]
  %v97 = vld [vmem:[%s1 + $0x210] sm:$0xff]
  %v98 = vld [vmem:[%s1 + $0x218] sm:$0xf]
  %v99 = vld [vmem:[%s1 + $0x21c] sm:$0xff]
  %v100 = vld [vmem:[%s1 + $0x224] sm:$0xff]
  %v101 = vld [vmem:[%s1 + $0x22c] sm:$0xff]
  %v102 = vld [vmem:[%s1 + $0x234] sm:$0xff]
  %v103 = vld [vmem:[%s1 + $0x23c] sm:$0xf]
  %v104 = vld [vmem:[%s1 + $0x240] sm:$0xff]
  %v105 = vld [vmem:[%s1 + $0x248] sm:$0xff]
  %v106 = vld [vmem:[%s1 + $0x250] sm:$0xff]
  %v107 = vld [vmem:[%s1 + $0x258] sm:$0xff]
  %v108 = vld [vmem:[%s1 + $0x260] sm:$0xf]
  %v109 = vld [vmem:[%s1 + $0x264] sm:$0xff]
  %v110 = vld [vmem:[%s1 + $0x26c] sm:$0xff]
  %v111 = vld [vmem:[%s1 + $0x274] sm:$0xff]
  %v112 = vld [vmem:[%s1 + $0x27c] sm:$0xff]
  %v113 = vld [vmem:[%s1 + $0x284] sm:$0xf]
  %v114 = vld [vmem:[%s1 + $0x288] sm:$0xff]
  %v115 = vld [vmem:[%s1 + $0x290] sm:$0xff]
  %v116 = vld [vmem:[%s1 + $0x298] sm:$0xff]
  %v117 = vld [vmem:[%s1 + $0x2a0] sm:$0xff]
  %v118 = vld [vmem:[%s1 + $0x2a8] sm:$0xf]
  %v119 = vld [vmem:[%s1 + $0x2ac] sm:$0xff]
  %v120 = vld [vmem:[%s1 + $0x2b4] sm:$0xff]
  %v121 = vld [vmem:[%s1 + $0x2bc] sm:$0xff]
  %v122 = vld [vmem:[%s1 + $0x2c4] sm:$0xff]
  %v123 = vld [vmem:[%s1 + $0x2cc] sm:$0xf]
  %v124 = vld [vmem:[%s1 + $0x2d0] sm:$0xff]
  %v125 = vld [vmem:[%s1 + $0x2d8] sm:$0xff]
  %v126 = vld [vmem:[%s1 + $0x2e0] sm:$0xff]
  %v127 = vld [vmem:[%s1 + $0x2e8] sm:$0xff]
  %v128 = vld [vmem:[%s1 + $0x2f0] sm:$0xf]
  %v129 = vld [vmem:[%s1 + $0x2f4] sm:$0xff]
  %v130 = vld [vmem:[%s1 + $0x2fc] sm:$0xff]
  %v131 = vld [vmem:[%s1 + $0x304] sm:$0xff]
  %v132 = vld [vmem:[%s1 + $0x30c] sm:$0xff]
  %v133 = vld [vmem:[%s1 + $0x314] sm:$0xf]
  %v134 = vld [vmem:[%s1 + $0x318] sm:$0xff]
  %v135 = vld [vmem:[%s1 + $0x320] sm:$0xff]
  %v136 = vld [vmem:[%s1 + $0x328] sm:$0xff]
  %v137 = vld [vmem:[%s1 + $0x330] sm:$0xff]
  %v138 = vld [vmem:[%s1 + $0x338] sm:$0xf]
  %v139 = vld [vmem:[%s1 + $0x33c] sm:$0xff]
  %v140 = vld [vmem:[%s1 + $0x344] sm:$0xff]
  %v141 = vld [vmem:[%s1 + $0x34c] sm:$0xff]
  %v142 = vld [vmem:[%s1 + $0x354] sm:$0xff]
  %v143 = vld [vmem:[%s1 + $0x35c] sm:$0xf]
  %v144 = vld [vmem:[%s1 + $0x360] sm:$0xff]
  %v145 = vld [vmem:[%s1 + $0x368] sm:$0xff]
  %v146 = vld [vmem:[%s1 + $0x370] sm:$0xff]
  %v147 = vld [vmem:[%s1 + $0x378] sm:$0xff]
  %v148 = vld [vmem:[%s1 + $0x380] sm:$0xf]
  %v149 = vld [vmem:[%s1 + $0x384] sm:$0xff]
  %v150 = vld [vmem:[%s1 + $0x38c] sm:$0xff]
  %v151 = vld [vmem:[%s1 + $0x394] sm:$0xff]
  %v152 = vld [vmem:[%s1 + $0x39c] sm:$0xff]
  %v153 = vld [vmem:[%s1 + $0x3a4] sm:$0xf]
  %v154 = vld [vmem:[%s1 + $0x3a8] sm:$0xff]
  %v155 = vld [vmem:[%s1 + $0x3b0] sm:$0xff]
  %v156 = vld [vmem:[%s1 + $0x3b8] sm:$0xff]
  %v157 = vld [vmem:[%s1 + $0x3c0] sm:$0xff]
  %v158 = vld [vmem:[%s1 + $0x3c8] sm:$0xf]
  %v159 = vld [vmem:[%s1 + $0x3cc] sm:$0xff]
  %v160 = vld [vmem:[%s1 + $0x3d4] sm:$0xff]
  %v161 = vld [vmem:[%s1 + $0x3dc] sm:$0xff]
  %v162 = vld [vmem:[%s1 + $0x3e4] sm:$0xff]
  %v163 = vld [vmem:[%s1 + $0x3ec] sm:$0xf]
  %v164 = vld [vmem:[%s1 + $0x3f0] sm:$0xff]
  %v165 = vld [vmem:[%s1 + $0x3f8] sm:$0xff]
  %v166 = vld [vmem:[%s1 + $0x400] sm:$0xff]
  %v167 = vld [vmem:[%s1 + $0x408] sm:$0xff]
  %v168 = vld [vmem:[%s1 + $0x410] sm:$0xf]
  %v169 = vld [vmem:[%s1 + $0x414] sm:$0xff]
  %v170 = vld [vmem:[%s1 + $0x41c] sm:$0xff]
  %v171 = vld [vmem:[%s1 + $0x424] sm:$0xff]
  %v172 = vld [vmem:[%s1 + $0x42c] sm:$0xff]
  %v173 = vld [vmem:[%s1 + $0x434] sm:$0xf]
  %v174 = vld [vmem:[%s1 + $0x438] sm:$0xff]
  %v175 = vld [vmem:[%s1 + $0x440] sm:$0xff]
  %v176 = vld [vmem:[%s1 + $0x448] sm:$0xff]
  %v177 = vld [vmem:[%s1 + $0x450] sm:$0xff]
  %v178 = vld [vmem:[%s1 + $0x458] sm:$0xf]
  %v179 = vld [vmem:[%s1 + $0x45c] sm:$0xff]
  %v180 = vld [vmem:[%s1 + $0x464] sm:$0xff]
  %v181 = vld [vmem:[%s1 + $0x46c] sm:$0xff]
  %v182 = vld [vmem:[%s1 + $0x474] sm:$0xff]
  %v183 = vld [vmem:[%s1 + $0x47c] sm:$0xf]
  %185 = vst [vmem:[#allocation1] ss:$9 sm:$0xff] %v23
  %v186 = vld [vmem:[#allocation1] sm:$0xff]
  %v187 = vld [vmem:[#allocation1 + $0x9] sm:$0xff]
  %v350 = vunpack.c.l.b16 %v24
  %v351 = vunpack.c.h.b16 %v24
  %v352 = vunpack.c.l.b16 %v25
  %v353 = vunpack.c.h.b16 %v25
  %v354 = vunpack.c.l.b16 %v26
  %v355 = vunpack.c.h.b16 %v26
  %v356 = vunpack.c.l.b16 %v27
  %v357 = vunpack.c.h.b16 %v27
  %v358 = vunpack.c.l.b16 %v28
  %v359 = vunpack.c.l.b16 %v29
  %v360 = vunpack.c.h.b16 %v29
  %v361 = vunpack.c.l.b16 %v30
  %v362 = vunpack.c.h.b16 %v30
  %v363 = vunpack.c.l.b16 %v31
  %v364 = vunpack.c.h.b16 %v31
  %v365 = vunpack.c.l.b16 %v32
  %v366 = vunpack.c.h.b16 %v32
  %v367 = vunpack.c.l.b16 %v33
  %v368 = vunpack.c.l.b16 %v34
  %v369 = vunpack.c.h.b16 %v34
  %v370 = vunpack.c.l.b16 %v35
  %v371 = vunpack.c.h.b16 %v35
  %v372 = vunpack.c.l.b16 %v36
  %v373 = vunpack.c.h.b16 %v36
  %v374 = vunpack.c.l.b16 %v37
  %v375 = vunpack.c.h.b16 %v37
  %v376 = vunpack.c.l.b16 %v38
  %v377 = vunpack.c.l.b16 %v39
  %v378 = vunpack.c.h.b16 %v39
  %v379 = vunpack.c.l.b16 %v40
  %v380 = vunpack.c.h.b16 %v40
  %v381 = vunpack.c.l.b16 %v41
  %v382 = vunpack.c.h.b16 %v41
  %v383 = vunpack.c.l.b16 %v42
  %v384 = vunpack.c.h.b16 %v42
  %v385 = vunpack.c.l.b16 %v43
  %v386 = vunpack.c.l.b16 %v44
  %v387 = vunpack.c.h.b16 %v44
  %v388 = vunpack.c.l.b16 %v45
  %v389 = vunpack.c.h.b16 %v45
  %v390 = vunpack.c.l.b16 %v46
  %v391 = vunpack.c.h.b16 %v46
  %v392 = vunpack.c.l.b16 %v47
  %v393 = vunpack.c.h.b16 %v47
  %v394 = vunpack.c.l.b16 %v48
  %v395 = vunpack.c.l.b16 %v49
  %v396 = vunpack.c.h.b16 %v49
  %v397 = vunpack.c.l.b16 %v50
  %v398 = vunpack.c.h.b16 %v50
  %v399 = vunpack.c.l.b16 %v51
  %v400 = vunpack.c.h.b16 %v51
  %v401 = vunpack.c.l.b16 %v52
  %v402 = vunpack.c.h.b16 %v52
  %v403 = vunpack.c.l.b16 %v53
  %v404 = vunpack.c.l.b16 %v54
  %v405 = vunpack.c.h.b16 %v54
  %v406 = vunpack.c.l.b16 %v55
  %v407 = vunpack.c.h.b16 %v55
  %v408 = vunpack.c.l.b16 %v56
  %v409 = vunpack.c.h.b16 %v56
  %v410 = vunpack.c.l.b16 %v57
  %v411 = vunpack.c.h.b16 %v57
  %v412 = vunpack.c.l.b16 %v58
  %v413 = vunpack.c.l.b16 %v59
  %v414 = vunpack.c.h.b16 %v59
  %v415 = vunpack.c.l.b16 %v60
  %v416 = vunpack.c.h.b16 %v60
  %v417 = vunpack.c.l.b16 %v61
  %v418 = vunpack.c.h.b16 %v61
  %v419 = vunpack.c.l.b16 %v62
  %v420 = vunpack.c.h.b16 %v62
  %v421 = vunpack.c.l.b16 %v63
  %v422 = vunpack.c.l.b16 %v64
  %v423 = vunpack.c.h.b16 %v64
  %v424 = vunpack.c.l.b16 %v65
  %v425 = vunpack.c.h.b16 %v65
  %v426 = vunpack.c.l.b16 %v66
  %v427 = vunpack.c.h.b16 %v66
  %v428 = vunpack.c.l.b16 %v67
  %v429 = vunpack.c.h.b16 %v67
  %v430 = vunpack.c.l.b16 %v68
  %v431 = vunpack.c.l.b16 %v69
  %v432 = vunpack.c.h.b16 %v69
  %v433 = vunpack.c.l.b16 %v70
  %v434 = vunpack.c.h.b16 %v70
  %v435 = vunpack.c.l.b16 %v71
  %v436 = vunpack.c.h.b16 %v71
  %v437 = vunpack.c.l.b16 %v72
  %v438 = vunpack.c.h.b16 %v72
  %v439 = vunpack.c.l.b16 %v73
  %v440 = vunpack.c.l.b16 %v74
  %v441 = vunpack.c.h.b16 %v74
  %v442 = vunpack.c.l.b16 %v75
  %v443 = vunpack.c.h.b16 %v75
  %v444 = vunpack.c.l.b16 %v76
  %v445 = vunpack.c.h.b16 %v76
  %v446 = vunpack.c.l.b16 %v77
  %v447 = vunpack.c.h.b16 %v77
  %v448 = vunpack.c.l.b16 %v78
  %v449 = vunpack.c.l.b16 %v79
  %v450 = vunpack.c.h.b16 %v79
  %v451 = vunpack.c.l.b16 %v80
  %v452 = vunpack.c.h.b16 %v80
  %v453 = vunpack.c.l.b16 %v81
  %v454 = vunpack.c.h.b16 %v81
  %v455 = vunpack.c.l.b16 %v82
  %v456 = vunpack.c.h.b16 %v82
  %v457 = vunpack.c.l.b16 %v83
  %v458 = vunpack.c.l.b16 %v84
  %v459 = vunpack.c.h.b16 %v84
  %v460 = vunpack.c.l.b16 %v85
  %v461 = vunpack.c.h.b16 %v85
  %v462 = vunpack.c.l.b16 %v86
  %v463 = vunpack.c.h.b16 %v86
  %v464 = vunpack.c.l.b16 %v87
  %v465 = vunpack.c.h.b16 %v87
  %v466 = vunpack.c.l.b16 %v88
  %v467 = vunpack.c.l.b16 %v89
  %v468 = vunpack.c.h.b16 %v89
  %v469 = vunpack.c.l.b16 %v90
  %v470 = vunpack.c.h.b16 %v90
  %v471 = vunpack.c.l.b16 %v91
  %v472 = vunpack.c.h.b16 %v91
  %v473 = vunpack.c.l.b16 %v92
  %v474 = vunpack.c.h.b16 %v92
  %v475 = vunpack.c.l.b16 %v93
  %v476 = vunpack.c.l.b16 %v94
  %v477 = vunpack.c.h.b16 %v94
  %v478 = vunpack.c.l.b16 %v95
  %v479 = vunpack.c.h.b16 %v95
  %v480 = vunpack.c.l.b16 %v96
  %v481 = vunpack.c.h.b16 %v96
  %v482 = vunpack.c.l.b16 %v97
  %v483 = vunpack.c.h.b16 %v97
  %v484 = vunpack.c.l.b16 %v98
  %v485 = vunpack.c.l.b16 %v99
  %v486 = vunpack.c.h.b16 %v99
  %v487 = vunpack.c.l.b16 %v100
  %v488 = vunpack.c.h.b16 %v100
  %v489 = vunpack.c.l.b16 %v101
  %v490 = vunpack.c.h.b16 %v101
  %v491 = vunpack.c.l.b16 %v102
  %v492 = vunpack.c.h.b16 %v102
  %v493 = vunpack.c.l.b16 %v103
  %v494 = vunpack.c.l.b16 %v104
  %v495 = vunpack.c.h.b16 %v104
  %v496 = vunpack.c.l.b16 %v105
  %v497 = vunpack.c.h.b16 %v105
  %v498 = vunpack.c.l.b16 %v106
  %v499 = vunpack.c.h.b16 %v106
  %v500 = vunpack.c.l.b16 %v107
  %v501 = vunpack.c.h.b16 %v107
  %v502 = vunpack.c.l.b16 %v108
  %v503 = vunpack.c.l.b16 %v109
  %v504 = vunpack.c.h.b16 %v109
  %v505 = vunpack.c.l.b16 %v110
  %v506 = vunpack.c.h.b16 %v110
  %v507 = vunpack.c.l.b16 %v111
  %v508 = vunpack.c.h.b16 %v111
  %v509 = vunpack.c.l.b16 %v112
  %v510 = vunpack.c.h.b16 %v112
  %v511 = vunpack.c.l.b16 %v113
  %v512 = vunpack.c.l.b16 %v114
  %v513 = vunpack.c.h.b16 %v114
  %v514 = vunpack.c.l.b16 %v115
  %v515 = vunpack.c.h.b16 %v115
  %v516 = vunpack.c.l.b16 %v116
  %v517 = vunpack.c.h.b16 %v116
  %v518 = vunpack.c.l.b16 %v117
  %v519 = vunpack.c.h.b16 %v117
  %v520 = vunpack.c.l.b16 %v118
  %v521 = vunpack.c.l.b16 %v119
  %v522 = vunpack.c.h.b16 %v119
  %v523 = vunpack.c.l.b16 %v120
  %v524 = vunpack.c.h.b16 %v120
  %v525 = vunpack.c.l.b16 %v121
  %v526 = vunpack.c.h.b16 %v121
  %v527 = vunpack.c.l.b16 %v122
  %v528 = vunpack.c.h.b16 %v122
  %v529 = vunpack.c.l.b16 %v123
  %v530 = vunpack.c.l.b16 %v124
  %v531 = vunpack.c.h.b16 %v124
  %v532 = vunpack.c.l.b16 %v125
  %v533 = vunpack.c.h.b16 %v125
  %v534 = vunpack.c.l.b16 %v126
  %v535 = vunpack.c.h.b16 %v126
  %v536 = vunpack.c.l.b16 %v127
  %v537 = vunpack.c.h.b16 %v127
  %v538 = vunpack.c.l.b16 %v128
  %v539 = vunpack.c.l.b16 %v129
  %v540 = vunpack.c.h.b16 %v129
  %v541 = vunpack.c.l.b16 %v130
  %v542 = vunpack.c.h.b16 %v130
  %v543 = vunpack.c.l.b16 %v131
  %v544 = vunpack.c.h.b16 %v131
  %v545 = vunpack.c.l.b16 %v132
  %v546 = vunpack.c.h.b16 %v132
  %v547 = vunpack.c.l.b16 %v133
  %v548 = vunpack.c.l.b16 %v134
  %v549 = vunpack.c.h.b16 %v134
  %v550 = vunpack.c.l.b16 %v135
  %v551 = vunpack.c.h.b16 %v135
  %v552 = vunpack.c.l.b16 %v136
  %v553 = vunpack.c.h.b16 %v136
  %v554 = vunpack.c.l.b16 %v137
  %v555 = vunpack.c.h.b16 %v137
  %v556 = vunpack.c.l.b16 %v138
  %v557 = vunpack.c.l.b16 %v139
  %v558 = vunpack.c.h.b16 %v139
  %v559 = vunpack.c.l.b16 %v140
  %v560 = vunpack.c.h.b16 %v140
  %v561 = vunpack.c.l.b16 %v141
  %v562 = vunpack.c.h.b16 %v141
  %v563 = vunpack.c.l.b16 %v142
  %v564 = vunpack.c.h.b16 %v142
  %v565 = vunpack.c.l.b16 %v143
  %v566 = vunpack.c.l.b16 %v144
  %v567 = vunpack.c.h.b16 %v144
  %v568 = vunpack.c.l.b16 %v145
  %v569 = vunpack.c.h.b16 %v145
  %v570 = vunpack.c.l.b16 %v146
  %v571 = vunpack.c.h.b16 %v146
  %v572 = vunpack.c.l.b16 %v147
  %v573 = vunpack.c.h.b16 %v147
  %v574 = vunpack.c.l.b16 %v148
  %v575 = vunpack.c.l.b16 %v149
  %v576 = vunpack.c.h.b16 %v149
  %v577 = vunpack.c.l.b16 %v150
  %v578 = vunpack.c.h.b16 %v150
  %v579 = vunpack.c.l.b16 %v151
  %v580 = vunpack.c.h.b16 %v151
  %v581 = vunpack.c.l.b16 %v152
  %v582 = vunpack.c.h.b16 %v152
  %v583 = vunpack.c.l.b16 %v153
  %v584 = vunpack.c.l.b16 %v154
  %v585 = vunpack.c.h.b16 %v154
  %v586 = vunpack.c.l.b16 %v155
  %v587 = vunpack.c.h.b16 %v155
  %v588 = vunpack.c.l.b16 %v156
  %v589 = vunpack.c.h.b16 %v156
  %v590 = vunpack.c.l.b16 %v157
  %v591 = vunpack.c.h.b16 %v157
  %v592 = vunpack.c.l.b16 %v158
  %v593 = vunpack.c.l.b16 %v159
  %v594 = vunpack.c.h.b16 %v159
  %v595 = vunpack.c.l.b16 %v160
  %v596 = vunpack.c.h.b16 %v160
  %v597 = vunpack.c.l.b16 %v161
  %v598 = vunpack.c.h.b16 %v161
  %v599 = vunpack.c.l.b16 %v162
  %v600 = vunpack.c.h.b16 %v162
  %v601 = vunpack.c.l.b16 %v163
  %v602 = vunpack.c.l.b16 %v164
  %v603 = vunpack.c.h.b16 %v164
  %v604 = vunpack.c.l.b16 %v165
  %v605 = vunpack.c.h.b16 %v165
  %v606 = vunpack.c.l.b16 %v166
  %v607 = vunpack.c.h.b16 %v166
  %v608 = vunpack.c.l.b16 %v167
  %v609 = vunpack.c.h.b16 %v167
  %v610 = vunpack.c.l.b16 %v168
  %v611 = vunpack.c.l.b16 %v169
  %v612 = vunpack.c.h.b16 %v169
  %v613 = vunpack.c.l.b16 %v170
  %v614 = vunpack.c.h.b16 %v170
  %v615 = vunpack.c.l.b16 %v171
  %v616 = vunpack.c.h.b16 %v171
  %v617 = vunpack.c.l.b16 %v172
  %v618 = vunpack.c.h.b16 %v172
  %v619 = vunpack.c.l.b16 %v173
  %v620 = vunpack.c.l.b16 %v174
  %v621 = vunpack.c.h.b16 %v174
  %v622 = vunpack.c.l.b16 %v175
  %v623 = vunpack.c.h.b16 %v175
  %v624 = vunpack.c.l.b16 %v176
  %v625 = vunpack.c.h.b16 %v176
  %v626 = vunpack.c.l.b16 %v177
  %v627 = vunpack.c.h.b16 %v177
  %v628 = vunpack.c.l.b16 %v178
  %v629 = vunpack.c.l.b16 %v179
  %v630 = vunpack.c.h.b16 %v179
  %v631 = vunpack.c.l.b16 %v180
  %v632 = vunpack.c.h.b16 %v180
  %v633 = vunpack.c.l.b16 %v181
  %v634 = vunpack.c.h.b16 %v181
  %v635 = vunpack.c.l.b16 %v182
  %v636 = vunpack.c.h.b16 %v182
  %v637 = vunpack.c.l.b16 %v183
  %v638 = vpack.c.b16 %v359, %v350
  %v639 = vpack.c.b16 %v360, %v351
  %v640 = vpack.c.b16 %v361, %v352
  %v641 = vpack.c.b16 %v362, %v353
  %v642 = vpack.c.b16 %v363, %v354
  %v643 = vpack.c.b16 %v364, %v355
  %v644 = vpack.c.b16 %v365, %v356
  %v645 = vpack.c.b16 %v366, %v357
  %v646 = vpack.c.b16 %v367, %v358
  %v647 = vpack.c.b16 %v377, %v368
  %v648 = vpack.c.b16 %v378, %v369
  %v649 = vpack.c.b16 %v379, %v370
  %v650 = vpack.c.b16 %v380, %v371
  %v651 = vpack.c.b16 %v381, %v372
  %v652 = vpack.c.b16 %v382, %v373
  %v653 = vpack.c.b16 %v383, %v374
  %v654 = vpack.c.b16 %v384, %v375
  %v655 = vpack.c.b16 %v385, %v376
  %v656 = vpack.c.b16 %v395, %v386
  %v657 = vpack.c.b16 %v396, %v387
  %v658 = vpack.c.b16 %v397, %v388
  %v659 = vpack.c.b16 %v398, %v389
  %v660 = vpack.c.b16 %v399, %v390
  %v661 = vpack.c.b16 %v400, %v391
  %v662 = vpack.c.b16 %v401, %v392
  %v663 = vpack.c.b16 %v402, %v393
  %v664 = vpack.c.b16 %v403, %v394
  %v665 = vpack.c.b16 %v413, %v404
  %v666 = vpack.c.b16 %v414, %v405
  %v667 = vpack.c.b16 %v415, %v406
  %v668 = vpack.c.b16 %v416, %v407
  %v669 = vpack.c.b16 %v417, %v408
  %v670 = vpack.c.b16 %v418, %v409
  %v671 = vpack.c.b16 %v419, %v410
  %v672 = vpack.c.b16 %v420, %v411
  %v673 = vpack.c.b16 %v421, %v412
  %v674 = vpack.c.b16 %v431, %v422
  %v675 = vpack.c.b16 %v432, %v423
  %v676 = vpack.c.b16 %v433, %v424
  %v677 = vpack.c.b16 %v434, %v425
  %v678 = vpack.c.b16 %v435, %v426
  %v679 = vpack.c.b16 %v436, %v427
  %v680 = vpack.c.b16 %v437, %v428
  %v681 = vpack.c.b16 %v438, %v429
  %v682 = vpack.c.b16 %v439, %v430
  %v683 = vpack.c.b16 %v449, %v440
  %v684 = vpack.c.b16 %v450, %v441
  %v685 = vpack.c.b16 %v451, %v442
  %v686 = vpack.c.b16 %v452, %v443
  %v687 = vpack.c.b16 %v453, %v444
  %v688 = vpack.c.b16 %v454, %v445
  %v689 = vpack.c.b16 %v455, %v446
  %v690 = vpack.c.b16 %v456, %v447
  %v691 = vpack.c.b16 %v457, %v448
  %v692 = vpack.c.b16 %v467, %v458
  %v693 = vpack.c.b16 %v468, %v459
  %v694 = vpack.c.b16 %v469, %v460
  %v695 = vpack.c.b16 %v470, %v461
  %v696 = vpack.c.b16 %v471, %v462
  %v697 = vpack.c.b16 %v472, %v463
  %v698 = vpack.c.b16 %v473, %v464
  %v699 = vpack.c.b16 %v474, %v465
  %v700 = vpack.c.b16 %v475, %v466
  %v701 = vpack.c.b16 %v485, %v476
  %v702 = vpack.c.b16 %v486, %v477
  %v703 = vpack.c.b16 %v487, %v478
  %v704 = vpack.c.b16 %v488, %v479
  %v705 = vpack.c.b16 %v489, %v480
  %v706 = vpack.c.b16 %v490, %v481
  %v707 = vpack.c.b16 %v491, %v482
  %v708 = vpack.c.b16 %v492, %v483
  %v709 = vpack.c.b16 %v493, %v484
  %v710 = vpack.c.b16 %v503, %v494
  %v711 = vpack.c.b16 %v504, %v495
  %v712 = vpack.c.b16 %v505, %v496
  %v713 = vpack.c.b16 %v506, %v497
  %v714 = vpack.c.b16 %v507, %v498
  %v715 = vpack.c.b16 %v508, %v499
  %v716 = vpack.c.b16 %v509, %v500
  %v717 = vpack.c.b16 %v510, %v501
  %v718 = vpack.c.b16 %v511, %v502
  %v719 = vpack.c.b16 %v521, %v512
  %v720 = vpack.c.b16 %v522, %v513
  %v721 = vpack.c.b16 %v523, %v514
  %v722 = vpack.c.b16 %v524, %v515
  %v723 = vpack.c.b16 %v525, %v516
  %v724 = vpack.c.b16 %v526, %v517
  %v725 = vpack.c.b16 %v527, %v518
  %v726 = vpack.c.b16 %v528, %v519
  %v727 = vpack.c.b16 %v529, %v520
  %v728 = vpack.c.b16 %v539, %v530
  %v729 = vpack.c.b16 %v540, %v531
  %v730 = vpack.c.b16 %v541, %v532
  %v731 = vpack.c.b16 %v542, %v533
  %v732 = vpack.c.b16 %v543, %v534
  %v733 = vpack.c.b16 %v544, %v535
  %v734 = vpack.c.b16 %v545, %v536
  %v735 = vpack.c.b16 %v546, %v537
  %v736 = vpack.c.b16 %v547, %v538
  %v737 = vpack.c.b16 %v557, %v548
  %v738 = vpack.c.b16 %v558, %v549
  %v739 = vpack.c.b16 %v559, %v550
  %v740 = vpack.c.b16 %v560, %v551
  %v741 = vpack.c.b16 %v561, %v552
  %v742 = vpack.c.b16 %v562, %v553
  %v743 = vpack.c.b16 %v563, %v554
  %v744 = vpack.c.b16 %v564, %v555
  %v745 = vpack.c.b16 %v565, %v556
  %v746 = vpack.c.b16 %v575, %v566
  %v747 = vpack.c.b16 %v576, %v567
  %v748 = vpack.c.b16 %v577, %v568
  %v749 = vpack.c.b16 %v578, %v569
  %v750 = vpack.c.b16 %v579, %v570
  %v751 = vpack.c.b16 %v580, %v571
  %v752 = vpack.c.b16 %v581, %v572
  %v753 = vpack.c.b16 %v582, %v573
  %v754 = vpack.c.b16 %v583, %v574
  %v755 = vpack.c.b16 %v593, %v584
  %v756 = vpack.c.b16 %v594, %v585
  %v757 = vpack.c.b16 %v595, %v586
  %v758 = vpack.c.b16 %v596, %v587
  %v759 = vpack.c.b16 %v597, %v588
  %v760 = vpack.c.b16 %v598, %v589
  %v761 = vpack.c.b16 %v599, %v590
  %v762 = vpack.c.b16 %v600, %v591
  %v763 = vpack.c.b16 %v601, %v592
  %v764 = vpack.c.b16 %v611, %v602
  %v765 = vpack.c.b16 %v612, %v603
  %v766 = vpack.c.b16 %v613, %v604
  %v767 = vpack.c.b16 %v614, %v605
  %v768 = vpack.c.b16 %v615, %v606
  %v769 = vpack.c.b16 %v616, %v607
  %v770 = vpack.c.b16 %v617, %v608
  %v771 = vpack.c.b16 %v618, %v609
  %v772 = vpack.c.b16 %v619, %v610
  %v773 = vpack.c.b16 %v629, %v620
  %v774 = vpack.c.b16 %v630, %v621
  %v775 = vpack.c.b16 %v631, %v622
  %v776 = vpack.c.b16 %v632, %v623
  %v777 = vpack.c.b16 %v633, %v624
  %v778 = vpack.c.b16 %v634, %v625
  %v779 = vpack.c.b16 %v635, %v626
  %v780 = vpack.c.b16 %v636, %v627
  %v781 = vpack.c.b16 %v637, %v628
  %926 = vmatpush.bf16.msra.mxu0 %v701
  %927 = vmatpush.bf16.msra.mxu0 %v692
  %928 = vmatpush.bf16.msra.mxu0 %v683
  %929 = vmatpush.bf16.msra.mxu0 %v674
  %930 = vmatpush.bf16.msra.mxu0 %v665
  %931 = vmatpush.bf16.msra.mxu0 %v656
  %932 = vmatpush.bf16.msra.mxu0 %v647
  %933 = vmatpush.bf16.msra.mxu0 %v638
  %934 = vmatmul.bf16.gmra.mxu0 %v186
  %v935 = vpop.f32.mrf.mxu0
  %v936 = vadd.f32 0.0, %v935
  %v937 = vpop.f32.mrf.mxu0
  %938 = vdwg.mxu0
  %939 = vmatpush.bf16.msra.mxu0 %v773
  %940 = vmatpush.bf16.msra.mxu0 %v764
  %941 = vmatpush.bf16.msra.mxu0 %v755
  %942 = vmatpush.bf16.msra.mxu0 %v746
  %943 = vmatpush.bf16.msra.mxu0 %v737
  %944 = vmatpush.bf16.msra.mxu0 %v728
  %945 = vmatpush.bf16.msra.mxu0 %v719
  %946 = vmatpush.bf16.msra.mxu0 %v710
  %947 = vmatmul.bf16.gmra.mxu0 %v187
  %v948 = vpop.f32.mrf.mxu0
  %v949 = vadd.f32 %v936, %v948
  %v950 = vpop.f32.mrf.mxu0
  %951 = vdwg.mxu0
  %952 = vmatpush.bf16.msra.mxu0 %v702
  %953 = vmatpush.bf16.msra.mxu0 %v693
  %954 = vmatpush.bf16.msra.mxu0 %v684
  %955 = vmatpush.bf16.msra.mxu0 %v675
  %956 = vmatpush.bf16.msra.mxu0 %v666
  %957 = vmatpush.bf16.msra.mxu0 %v657
  %958 = vmatpush.bf16.msra.mxu0 %v648
  %959 = vmatpush.bf16.msra.mxu0 %v639
  %960 = vmatmul.bf16.gmra.mxu0 %v186
  %v961 = vpop.f32.mrf.mxu0
  %v962 = vadd.f32 0.0, %v961
  %v963 = vpop.f32.mrf.mxu0
  %964 = vdwg.mxu0
  %965 = vmatpush.bf16.msra.mxu0 %v774
  %966 = vmatpush.bf16.msra.mxu0 %v765
  %967 = vmatpush.bf16.msra.mxu0 %v756
  %968 = vmatpush.bf16.msra.mxu0 %v747
  %969 = vmatpush.bf16.msra.mxu0 %v738
  %970 = vmatpush.bf16.msra.mxu0 %v729
  %971 = vmatpush.bf16.msra.mxu0 %v720
  %972 = vmatpush.bf16.msra.mxu0 %v711
  %973 = vmatmul.bf16.gmra.mxu0 %v187
  %v974 = vpop.f32.mrf.mxu0
  %v975 = vadd.f32 %v962, %v974
  %v976 = vpop.f32.mrf.mxu0
  %977 = vdwg.mxu0
  %978 = vmatpush.bf16.msra.mxu0 %v703
  %979 = vmatpush.bf16.msra.mxu0 %v694
  %980 = vmatpush.bf16.msra.mxu0 %v685
  %981 = vmatpush.bf16.msra.mxu0 %v676
  %982 = vmatpush.bf16.msra.mxu0 %v667
  %983 = vmatpush.bf16.msra.mxu0 %v658
  %984 = vmatpush.bf16.msra.mxu0 %v649
  %985 = vmatpush.bf16.msra.mxu0 %v640
  %986 = vmatmul.bf16.gmra.mxu0 %v186
  %v987 = vpop.f32.mrf.mxu0
  %v988 = vadd.f32 0.0, %v987
  %v989 = vpop.f32.mrf.mxu0
  %990 = vdwg.mxu0
  %991 = vmatpush.bf16.msra.mxu0 %v775
  %992 = vmatpush.bf16.msra.mxu0 %v766
  %993 = vmatpush.bf16.msra.mxu0 %v757
  %994 = vmatpush.bf16.msra.mxu0 %v748
  %995 = vmatpush.bf16.msra.mxu0 %v739
  %996 = vmatpush.bf16.msra.mxu0 %v730
  %997 = vmatpush.bf16.msra.mxu0 %v721
  %998 = vmatpush.bf16.msra.mxu0 %v712
  %999 = vmatmul.bf16.gmra.mxu0 %v187
  %v1000 = vpop.f32.mrf.mxu0
  %v1001 = vadd.f32 %v988, %v1000
  %v1002 = vpop.f32.mrf.mxu0
  %1003 = vdwg.mxu0
  %1004 = vmatpush.bf16.msra.mxu0 %v704
  %1005 = vmatpush.bf16.msra.mxu0 %v695
  %1006 = vmatpush.bf16.msra.mxu0 %v686
  %1007 = vmatpush.bf16.msra.mxu0 %v677
  %1008 = vmatpush.bf16.msra.mxu0 %v668
  %1009 = vmatpush.bf16.msra.mxu0 %v659
  %1010 = vmatpush.bf16.msra.mxu0 %v650
  %1011 = vmatpush.bf16.msra.mxu0 %v641
  %1012 = vmatmul.bf16.gmra.mxu0 %v186
  %v1013 = vpop.f32.mrf.mxu0
  %v1014 = vadd.f32 0.0, %v1013
  %v1015 = vpop.f32.mrf.mxu0
  %1016 = vdwg.mxu0
  %1017 = vmatpush.bf16.msra.mxu0 %v776
  %1018 = vmatpush.bf16.msra.mxu0 %v767
  %1019 = vmatpush.bf16.msra.mxu0 %v758
  %1020 = vmatpush.bf16.msra.mxu0 %v749
  %1021 = vmatpush.bf16.msra.mxu0 %v740
  %1022 = vmatpush.bf16.msra.mxu0 %v731
  %1023 = vmatpush.bf16.msra.mxu0 %v722
  %1024 = vmatpush.bf16.msra.mxu0 %v713
  %1025 = vmatmul.bf16.gmra.mxu0 %v187
  %v1026 = vpop.f32.mrf.mxu0
  %v1027 = vadd.f32 %v1014, %v1026
  %v1028 = vpop.f32.mrf.mxu0
  %1029 = vdwg.mxu0
  %1030 = vmatpush.bf16.msra.mxu0 %v705
  %1031 = vmatpush.bf16.msra.mxu0 %v696
  %1032 = vmatpush.bf16.msra.mxu0 %v687
  %1033 = vmatpush.bf16.msra.mxu0 %v678
  %1034 = vmatpush.bf16.msra.mxu0 %v669
  %1035 = vmatpush.bf16.msra.mxu0 %v660
  %1036 = vmatpush.bf16.msra.mxu0 %v651
  %1037 = vmatpush.bf16.msra.mxu0 %v642
  %1038 = vmatmul.bf16.gmra.mxu0 %v186
  %v1039 = vpop.f32.mrf.mxu0
  %v1040 = vadd.f32 0.0, %v1039
  %v1041 = vpop.f32.mrf.mxu0
  %1042 = vdwg.mxu0
  %1043 = vmatpush.bf16.msra.mxu0 %v777
  %1044 = vmatpush.bf16.msra.mxu0 %v768
  %1045 = vmatpush.bf16.msra.mxu0 %v759
  %1046 = vmatpush.bf16.msra.mxu0 %v750
  %1047 = vmatpush.bf16.msra.mxu0 %v741
  %1048 = vmatpush.bf16.msra.mxu0 %v732
  %1049 = vmatpush.bf16.msra.mxu0 %v723
  %1050 = vmatpush.bf16.msra.mxu0 %v714
  %1051 = vmatmul.bf16.gmra.mxu0 %v187
  %v1052 = vpop.f32.mrf.mxu0
  %v1053 = vadd.f32 %v1040, %v1052
  %v1054 = vpop.f32.mrf.mxu0
  %1055 = vdwg.mxu0
  %1056 = vmatpush.bf16.msra.mxu0 %v706
  %1057 = vmatpush.bf16.msra.mxu0 %v697
  %1058 = vmatpush.bf16.msra.mxu0 %v688
  %1059 = vmatpush.bf16.msra.mxu0 %v679
  %1060 = vmatpush.bf16.msra.mxu0 %v670
  %1061 = vmatpush.bf16.msra.mxu0 %v661
  %1062 = vmatpush.bf16.msra.mxu0 %v652
  %1063 = vmatpush.bf16.msra.mxu0 %v643
  %1064 = vmatmul.bf16.gmra.mxu0 %v186
  %v1065 = vpop.f32.mrf.mxu0
  %v1066 = vadd.f32 0.0, %v1065
  %v1067 = vpop.f32.mrf.mxu0
  %1068 = vdwg.mxu0
  %1069 = vmatpush.bf16.msra.mxu0 %v778
  %1070 = vmatpush.bf16.msra.mxu0 %v769
  %1071 = vmatpush.bf16.msra.mxu0 %v760
  %1072 = vmatpush.bf16.msra.mxu0 %v751
  %1073 = vmatpush.bf16.msra.mxu0 %v742
  %1074 = vmatpush.bf16.msra.mxu0 %v733
  %1075 = vmatpush.bf16.msra.mxu0 %v724
  %1076 = vmatpush.bf16.msra.mxu0 %v715
  %1077 = vmatmul.bf16.gmra.mxu0 %v187
  %v1078 = vpop.f32.mrf.mxu0
  %v1079 = vadd.f32 %v1066, %v1078
  %v1080 = vpop.f32.mrf.mxu0
  %1081 = vdwg.mxu0
  %1082 = vmatpush.bf16.msra.mxu0 %v707
  %1083 = vmatpush.bf16.msra.mxu0 %v698
  %1084 = vmatpush.bf16.msra.mxu0 %v689
  %1085 = vmatpush.bf16.msra.mxu0 %v680
  %1086 = vmatpush.bf16.msra.mxu0 %v671
  %1087 = vmatpush.bf16.msra.mxu0 %v662
  %1088 = vmatpush.bf16.msra.mxu0 %v653
  %1089 = vmatpush.bf16.msra.mxu0 %v644
  %1090 = vmatmul.bf16.gmra.mxu0 %v186
  %v1091 = vpop.f32.mrf.mxu0
  %v1092 = vadd.f32 0.0, %v1091
  %v1093 = vpop.f32.mrf.mxu0
  %1094 = vdwg.mxu0
  %1095 = vmatpush.bf16.msra.mxu0 %v779
  %1096 = vmatpush.bf16.msra.mxu0 %v770
  %1097 = vmatpush.bf16.msra.mxu0 %v761
  %1098 = vmatpush.bf16.msra.mxu0 %v752
  %1099 = vmatpush.bf16.msra.mxu0 %v743
  %1100 = vmatpush.bf16.msra.mxu0 %v734
  %1101 = vmatpush.bf16.msra.mxu0 %v725
  %1102 = vmatpush.bf16.msra.mxu0 %v716
  %1103 = vmatmul.bf16.gmra.mxu0 %v187
  %v1104 = vpop.f32.mrf.mxu0
  %v1105 = vadd.f32 %v1092, %v1104
  %v1106 = vpop.f32.mrf.mxu0
  %1107 = vdwg.mxu0
  %1108 = vmatpush.bf16.msra.mxu0 %v708
  %1109 = vmatpush.bf16.msra.mxu0 %v699
  %1110 = vmatpush.bf16.msra.mxu0 %v690
  %1111 = vmatpush.bf16.msra.mxu0 %v681
  %1112 = vmatpush.bf16.msra.mxu0 %v672
  %1113 = vmatpush.bf16.msra.mxu0 %v663
  %1114 = vmatpush.bf16.msra.mxu0 %v654
  %1115 = vmatpush.bf16.msra.mxu0 %v645
  %1116 = vmatmul.bf16.gmra.mxu0 %v186
  %v1117 = vpop.f32.mrf.mxu0
  %v1118 = vadd.f32 0.0, %v1117
  %v1119 = vpop.f32.mrf.mxu0
  %1120 = vdwg.mxu0
  %1121 = vmatpush.bf16.msra.mxu0 %v780
  %1122 = vmatpush.bf16.msra.mxu0 %v771
  %1123 = vmatpush.bf16.msra.mxu0 %v762
  %1124 = vmatpush.bf16.msra.mxu0 %v753
  %1125 = vmatpush.bf16.msra.mxu0 %v744
  %1126 = vmatpush.bf16.msra.mxu0 %v735
  %1127 = vmatpush.bf16.msra.mxu0 %v726
  %1128 = vmatpush.bf16.msra.mxu0 %v717
  %1129 = vmatmul.bf16.gmra.mxu0 %v187
  %v1130 = vpop.f32.mrf.mxu0
  %v1131 = vadd.f32 %v1118, %v1130
  %v1132 = vpop.f32.mrf.mxu0
  %1133 = vdwg.mxu0
  %1134 = vmatpush.bf16.msra.mxu0 %v709
  %1135 = vmatpush.bf16.msra.mxu0 %v700
  %1136 = vmatpush.bf16.msra.mxu0 %v691
  %1137 = vmatpush.bf16.msra.mxu0 %v682
  %1138 = vmatpush.bf16.msra.mxu0 %v673
  %1139 = vmatpush.bf16.msra.mxu0 %v664
  %1140 = vmatpush.bf16.msra.mxu0 %v655
  %1141 = vmatpush.bf16.msra.mxu0 %v646
  %1142 = vmatmul.bf16.gmra.mxu0 %v186
  %v1143 = vpop.f32.mrf.mxu0
  %v1144 = vadd.f32 0.0, %v1143
  %v1145 = vpop.f32.mrf.mxu0
  %1146 = vdwg.mxu0
  %1147 = vmatpush.bf16.msra.mxu0 %v781
  %1148 = vmatpush.bf16.msra.mxu0 %v772
  %1149 = vmatpush.bf16.msra.mxu0 %v763
  %1150 = vmatpush.bf16.msra.mxu0 %v754
  %1151 = vmatpush.bf16.msra.mxu0 %v745
  %1152 = vmatpush.bf16.msra.mxu0 %v736
  %1153 = vmatpush.bf16.msra.mxu0 %v727
  %1154 = vmatpush.bf16.msra.mxu0 %v718
  %1155 = vmatmul.bf16.gmra.mxu0 %v187
  %v1156 = vpop.f32.mrf.mxu0
  %v1157 = vadd.f32 %v1144, %v1156
  %v1158 = vpop.f32.mrf.mxu0
  %1159 = vdwg.mxu0
  %v1160 = vld [vmem:[%s2] sm:$0xff]
  %v1161 = vld [vmem:[%s2 + $0x8] sm:$0xff]
  %v1162 = vld [vmem:[%s2 + $0x10] sm:$0xff]
  %v1163 = vld [vmem:[%s2 + $0x18] sm:$0xff]
  %v1164 = vld [vmem:[%s2 + $0x20] sm:$0xff]
  %v1165 = vld [vmem:[%s2 + $0x28] sm:$0xff]
  %v1166 = vld [vmem:[%s2 + $0x30] sm:$0xff]
  %v1167 = vld [vmem:[%s2 + $0x38] sm:$0xff]
  %v1168 = vld [vmem:[%s2 + $0x40] sm:$0xff]
  %v1169 = vld [vmem:[%s2 + $0x48] sm:$0xff]
  %v1170 = vld [vmem:[%s2 + $0x50] sm:$0xff]
  %v1171 = vld [vmem:[%s2 + $0x58] sm:$0xff]
  %v1172 = vld [vmem:[%s2 + $0x60] sm:$0xff]
  %v1173 = vld [vmem:[%s2 + $0x68] sm:$0xff]
  %v1174 = vld [vmem:[%s2 + $0x70] sm:$0xff]
  %v1175 = vld [vmem:[%s2 + $0x78] sm:$0xff]
  %v1176 = vld [vmem:[%s2 + $0x80] sm:$0xff]
  %v1177 = vld [vmem:[%s2 + $0x88] sm:$0xff]
  %v1178 = vld [vmem:[%s2 + $0x90] sm:$0xff]
  %v1179 = vld [vmem:[%s2 + $0x98] sm:$0xff]
  %v1180 = vld [vmem:[%s2 + $0xa0] sm:$0xff]
  %v1181 = vld [vmem:[%s2 + $0xa8] sm:$0xff]
  %v1182 = vld [vmem:[%s2 + $0xb0] sm:$0xff]
  %v1183 = vld [vmem:[%s2 + $0xb8] sm:$0xff]
  %v1184 = vld [vmem:[%s2 + $0xc0] sm:$0xff]
  %v1185 = vld [vmem:[%s2 + $0xc8] sm:$0xff]
  %v1186 = vld [vmem:[%s2 + $0xd0] sm:$0xff]
  %v1187 = vld [vmem:[%s2 + $0xd8] sm:$0xff]
  %v1188 = vld [vmem:[%s2 + $0xe0] sm:$0xff]
  %v1189 = vld [vmem:[%s2 + $0xe8] sm:$0xff]
  %v1190 = vld [vmem:[%s2 + $0xf0] sm:$0xff]
  %v1191 = vld [vmem:[%s2 + $0xf8] sm:$0xff]
  %v1192 = vld [vmem:[%s2 + $0x100] sm:$0xff]
  %v1193 = vld [vmem:[%s2 + $0x108] sm:$0xff]
  %v1194 = vld [vmem:[%s2 + $0x110] sm:$0xff]
  %v1195 = vld [vmem:[%s2 + $0x118] sm:$0xff]
  %v1196 = vld [vmem:[%s2 + $0x120] sm:$0xff]
  %v1197 = vld [vmem:[%s2 + $0x128] sm:$0xff]
  %v1198 = vld [vmem:[%s2 + $0x130] sm:$0xff]
  %v1199 = vld [vmem:[%s2 + $0x138] sm:$0xff]
  %v1200 = vld [vmem:[%s2 + $0x140] sm:$0xff]
  %v1201 = vld [vmem:[%s2 + $0x148] sm:$0xff]
  %v1202 = vld [vmem:[%s2 + $0x150] sm:$0xff]
  %v1203 = vld [vmem:[%s2 + $0x158] sm:$0xff]
  %v1204 = vld [vmem:[%s2 + $0x160] sm:$0xff]
  %v1205 = vld [vmem:[%s2 + $0x168] sm:$0xff]
  %v1206 = vld [vmem:[%s2 + $0x170] sm:$0xff]
  %v1207 = vld [vmem:[%s2 + $0x178] sm:$0xff]
  %v1208 = vld [vmem:[%s2 + $0x180] sm:$0xff]
  %v1209 = vld [vmem:[%s2 + $0x188] sm:$0xff]
  %v1210 = vld [vmem:[%s2 + $0x190] sm:$0xff]
  %v1211 = vld [vmem:[%s2 + $0x198] sm:$0xff]
  %v1212 = vld [vmem:[%s2 + $0x1a0] sm:$0xff]
  %v1213 = vld [vmem:[%s2 + $0x1a8] sm:$0xff]
  %v1214 = vld [vmem:[%s2 + $0x1b0] sm:$0xff]
  %v1215 = vld [vmem:[%s2 + $0x1b8] sm:$0xff]
  %v1216 = vld [vmem:[%s2 + $0x1c0] sm:$0xff]
  %v1217 = vld [vmem:[%s2 + $0x1c8] sm:$0xff]
  %v1218 = vld [vmem:[%s2 + $0x1d0] sm:$0xff]
  %v1219 = vld [vmem:[%s2 + $0x1d8] sm:$0xff]
  %v1220 = vld [vmem:[%s2 + $0x1e0] sm:$0xff]
  %v1221 = vld [vmem:[%s2 + $0x1e8] sm:$0xff]
  %v1222 = vld [vmem:[%s2 + $0x1f0] sm:$0xff]
  %v1223 = vld [vmem:[%s2 + $0x1f8] sm:$0xff]
  %v1224 = vld [vmem:[%s2 + $0x200] sm:$0xff]
  %v1225 = vld [vmem:[%s2 + $0x208] sm:$0xff]
  %v1226 = vld [vmem:[%s2 + $0x210] sm:$0xff]
  %v1227 = vld [vmem:[%s2 + $0x218] sm:$0xff]
  %v1228 = vld [vmem:[%s2 + $0x220] sm:$0xff]
  %v1229 = vld [vmem:[%s2 + $0x228] sm:$0xff]
  %v1230 = vld [vmem:[%s2 + $0x230] sm:$0xff]
  %v1231 = vld [vmem:[%s2 + $0x238] sm:$0xff]
  %v1232 = vld [vmem:[%s2 + $0x240] sm:$0xff]
  %v1233 = vld [vmem:[%s2 + $0x248] sm:$0xff]
  %v1234 = vld [vmem:[%s2 + $0x250] sm:$0xff]
  %v1235 = vld [vmem:[%s2 + $0x258] sm:$0xff]
  %v1236 = vld [vmem:[%s2 + $0x260] sm:$0xff]
  %v1237 = vld [vmem:[%s2 + $0x268] sm:$0xff]
  %v1238 = vld [vmem:[%s2 + $0x270] sm:$0xff]
  %v1239 = vld [vmem:[%s2 + $0x278] sm:$0xff]
  %v1240 = vld [vmem:[%s2 + $0x280] sm:$0xff]
  %v1241 = vld [vmem:[%s2 + $0x288] sm:$0xff]
  %v1242 = vld [vmem:[%s2 + $0x290] sm:$0xff]
  %v1243 = vld [vmem:[%s2 + $0x298] sm:$0xff]
  %v1244 = vld [vmem:[%s2 + $0x2a0] sm:$0xff]
  %v1245 = vld [vmem:[%s2 + $0x2a8] sm:$0xff]
  %v1246 = vld [vmem:[%s2 + $0x2b0] sm:$0xff]
  %v1247 = vld [vmem:[%s2 + $0x2b8] sm:$0xff]
  %v1248 = vld [vmem:[%s2 + $0x2c0] sm:$0xff]
  %v1249 = vld [vmem:[%s2 + $0x2c8] sm:$0xff]
  %v1250 = vld [vmem:[%s2 + $0x2d0] sm:$0xff]
  %v1251 = vld [vmem:[%s2 + $0x2d8] sm:$0xff]
  %v1252 = vld [vmem:[%s2 + $0x2e0] sm:$0xff]
  %v1253 = vld [vmem:[%s2 + $0x2e8] sm:$0xff]
  %v1254 = vld [vmem:[%s2 + $0x2f0] sm:$0xff]
  %v1255 = vld [vmem:[%s2 + $0x2f8] sm:$0xff]
  %v1256 = vld [vmem:[%s2 + $0x300] sm:$0xff]
  %v1257 = vld [vmem:[%s2 + $0x308] sm:$0xff]
  %v1258 = vld [vmem:[%s2 + $0x310] sm:$0xff]
  %v1259 = vld [vmem:[%s2 + $0x318] sm:$0xff]
  %v1260 = vld [vmem:[%s2 + $0x320] sm:$0xff]
  %v1261 = vld [vmem:[%s2 + $0x328] sm:$0xff]
  %v1262 = vld [vmem:[%s2 + $0x330] sm:$0xff]
  %v1263 = vld [vmem:[%s2 + $0x338] sm:$0xff]
  %v1264 = vld [vmem:[%s2 + $0x340] sm:$0xff]
  %v1265 = vld [vmem:[%s2 + $0x348] sm:$0xff]
  %v1266 = vld [vmem:[%s2 + $0x350] sm:$0xff]
  %v1267 = vld [vmem:[%s2 + $0x358] sm:$0xff]
  %v1268 = vld [vmem:[%s2 + $0x360] sm:$0xff]
  %v1269 = vld [vmem:[%s2 + $0x368] sm:$0xff]
  %v1270 = vld [vmem:[%s2 + $0x370] sm:$0xff]
  %v1271 = vld [vmem:[%s2 + $0x378] sm:$0xff]
  %v1272 = vld [vmem:[%s2 + $0x380] sm:$0xff]
  %v1273 = vld [vmem:[%s2 + $0x388] sm:$0xff]
  %v1274 = vld [vmem:[%s2 + $0x390] sm:$0xff]
  %v1275 = vld [vmem:[%s2 + $0x398] sm:$0xff]
  %v1276 = vld [vmem:[%s2 + $0x3a0] sm:$0xff]
  %v1277 = vld [vmem:[%s2 + $0x3a8] sm:$0xff]
  %v1278 = vld [vmem:[%s2 + $0x3b0] sm:$0xff]
  %v1279 = vld [vmem:[%s2 + $0x3b8] sm:$0xff]
  %v1280 = vld [vmem:[%s2 + $0x3c0] sm:$0xff]
  %v1281 = vld [vmem:[%s2 + $0x3c8] sm:$0xff]
  %v1282 = vld [vmem:[%s2 + $0x3d0] sm:$0xff]
  %v1283 = vld [vmem:[%s2 + $0x3d8] sm:$0xff]
  %v1284 = vld [vmem:[%s2 + $0x3e0] sm:$0xff]
  %v1285 = vld [vmem:[%s2 + $0x3e8] sm:$0xff]
  %v1286 = vld [vmem:[%s2 + $0x3f0] sm:$0xff]
  %v1287 = vld [vmem:[%s2 + $0x3f8] sm:$0xff]
  %v1288 = vld [vmem:[%s2 + $0x400] sm:$0xff]
  %v1289 = vld [vmem:[%s2 + $0x408] sm:$0xff]
  %v1290 = vld [vmem:[%s2 + $0x410] sm:$0xff]
  %v1291 = vld [vmem:[%s2 + $0x418] sm:$0xff]
  %v1292 = vld [vmem:[%s2 + $0x420] sm:$0xff]
  %v1293 = vld [vmem:[%s2 + $0x428] sm:$0xff]
  %v1294 = vld [vmem:[%s2 + $0x430] sm:$0xff]
  %v1295 = vld [vmem:[%s2 + $0x438] sm:$0xff]
  %v1296 = vld [vmem:[%s2 + $0x440] sm:$0xff]
  %v1297 = vld [vmem:[%s2 + $0x448] sm:$0xff]
  %v1298 = vld [vmem:[%s2 + $0x450] sm:$0xff]
  %v1299 = vld [vmem:[%s2 + $0x458] sm:$0xff]
  %v1300 = vld [vmem:[%s2 + $0x460] sm:$0xff]
  %v1301 = vld [vmem:[%s2 + $0x468] sm:$0xff]
  %v1302 = vld [vmem:[%s2 + $0x470] sm:$0xff]
  %v1303 = vld [vmem:[%s2 + $0x478] sm:$0xff]
  %1304 = vmatpush.msra.mxu0 %v1175
  %1305 = vmatpush.msra.mxu0 %v1174
  %1306 = vmatpush.msra.mxu0 %v1173
  %1307 = vmatpush.msra.mxu0 %v1172
  %1308 = vmatpush.msra.mxu0 %v1171
  %1309 = vmatpush.msra.mxu0 %v1170
  %1310 = vmatpush.msra.mxu0 %v1169
  %1311 = vmatpush.msra.mxu0 %v1168
  %1312 = vmatpush.msra.mxu0 %v1167
  %1313 = vmatpush.msra.mxu0 %v1166
  %1314 = vmatpush.msra.mxu0 %v1165
  %1315 = vmatpush.msra.mxu0 %v1164
  %1316 = vmatpush.msra.mxu0 %v1163
  %1317 = vmatpush.msra.mxu0 %v1162
  %1318 = vmatpush.msra.mxu0 %v1161
  %1319 = vmatpush.msra.mxu0 %v1160
  %1320 = vmatmul.f32.gmra.mxu0 %v949
  %v1321 = vpop.f32.mrf.mxu0
  %v1322 = vadd.f32 0.0, %v1321
  %1323 = vdwg.mxu0
  %1324 = vmatpush.msra.mxu0 %v1191
  %1325 = vmatpush.msra.mxu0 %v1190
  %1326 = vmatpush.msra.mxu0 %v1189
  %1327 = vmatpush.msra.mxu0 %v1188
  %1328 = vmatpush.msra.mxu0 %v1187
  %1329 = vmatpush.msra.mxu0 %v1186
  %1330 = vmatpush.msra.mxu0 %v1185
  %1331 = vmatpush.msra.mxu0 %v1184
  %1332 = vmatpush.msra.mxu0 %v1183
  %1333 = vmatpush.msra.mxu0 %v1182
  %1334 = vmatpush.msra.mxu0 %v1181
  %1335 = vmatpush.msra.mxu0 %v1180
  %1336 = vmatpush.msra.mxu0 %v1179
  %1337 = vmatpush.msra.mxu0 %v1178
  %1338 = vmatpush.msra.mxu0 %v1177
  %1339 = vmatpush.msra.mxu0 %v1176
  %1340 = vmatmul.f32.gmra.mxu0 %v975
  %v1341 = vpop.f32.mrf.mxu0
  %v1342 = vadd.f32 %v1322, %v1341
  %1343 = vdwg.mxu0
  %1344 = vmatpush.msra.mxu0 %v1207
  %1345 = vmatpush.msra.mxu0 %v1206
  %1346 = vmatpush.msra.mxu0 %v1205
  %1347 = vmatpush.msra.mxu0 %v1204
  %1348 = vmatpush.msra.mxu0 %v1203
  %1349 = vmatpush.msra.mxu0 %v1202
  %1350 = vmatpush.msra.mxu0 %v1201
  %1351 = vmatpush.msra.mxu0 %v1200
  %1352 = vmatpush.msra.mxu0 %v1199
  %1353 = vmatpush.msra.mxu0 %v1198
  %1354 = vmatpush.msra.mxu0 %v1197
  %1355 = vmatpush.msra.mxu0 %v1196
  %1356 = vmatpush.msra.mxu0 %v1195
  %1357 = vmatpush.msra.mxu0 %v1194
  %1358 = vmatpush.msra.mxu0 %v1193
  %1359 = vmatpush.msra.mxu0 %v1192
  %1360 = vmatmul.f32.gmra.mxu0 %v1001
  %v1361 = vpop.f32.mrf.mxu0
  %v1362 = vadd.f32 %v1342, %v1361
  %1363 = vdwg.mxu0
  %1364 = vmatpush.msra.mxu0 %v1223
  %1365 = vmatpush.msra.mxu0 %v1222
  %1366 = vmatpush.msra.mxu0 %v1221
  %1367 = vmatpush.msra.mxu0 %v1220
  %1368 = vmatpush.msra.mxu0 %v1219
  %1369 = vmatpush.msra.mxu0 %v1218
  %1370 = vmatpush.msra.mxu0 %v1217
  %1371 = vmatpush.msra.mxu0 %v1216
  %1372 = vmatpush.msra.mxu0 %v1215
  %1373 = vmatpush.msra.mxu0 %v1214
  %1374 = vmatpush.msra.mxu0 %v1213
  %1375 = vmatpush.msra.mxu0 %v1212
  %1376 = vmatpush.msra.mxu0 %v1211
  %1377 = vmatpush.msra.mxu0 %v1210
  %1378 = vmatpush.msra.mxu0 %v1209
  %1379 = vmatpush.msra.mxu0 %v1208
  %1380 = vmatmul.f32.gmra.mxu0 %v1027
  %v1381 = vpop.f32.mrf.mxu0
  %v1382 = vadd.f32 %v1362, %v1381
  %1383 = vdwg.mxu0
  %1384 = vmatpush.msra.mxu0 %v1239
  %1385 = vmatpush.msra.mxu0 %v1238
  %1386 = vmatpush.msra.mxu0 %v1237
  %1387 = vmatpush.msra.mxu0 %v1236
  %1388 = vmatpush.msra.mxu0 %v1235
  %1389 = vmatpush.msra.mxu0 %v1234
  %1390 = vmatpush.msra.mxu0 %v1233
  %1391 = vmatpush.msra.mxu0 %v1232
  %1392 = vmatpush.msra.mxu0 %v1231
  %1393 = vmatpush.msra.mxu0 %v1230
  %1394 = vmatpush.msra.mxu0 %v1229
  %1395 = vmatpush.msra.mxu0 %v1228
  %1396 = vmatpush.msra.mxu0 %v1227
  %1397 = vmatpush.msra.mxu0 %v1226
  %1398 = vmatpush.msra.mxu0 %v1225
  %1399 = vmatpush.msra.mxu0 %v1224
  %1400 = vmatmul.f32.gmra.mxu0 %v1053
  %v1401 = vpop.f32.mrf.mxu0
  %v1402 = vadd.f32 %v1382, %v1401
  %1403 = vdwg.mxu0
  %1404 = vmatpush.msra.mxu0 %v1255
  %1405 = vmatpush.msra.mxu0 %v1254
  %1406 = vmatpush.msra.mxu0 %v1253
  %1407 = vmatpush.msra.mxu0 %v1252
  %1408 = vmatpush.msra.mxu0 %v1251
  %1409 = vmatpush.msra.mxu0 %v1250
  %1410 = vmatpush.msra.mxu0 %v1249
  %1411 = vmatpush.msra.mxu0 %v1248
  %1412 = vmatpush.msra.mxu0 %v1247
  %1413 = vmatpush.msra.mxu0 %v1246
  %1414 = vmatpush.msra.mxu0 %v1245
  %1415 = vmatpush.msra.mxu0 %v1244
  %1416 = vmatpush.msra.mxu0 %v1243
  %1417 = vmatpush.msra.mxu0 %v1242
  %1418 = vmatpush.msra.mxu0 %v1241
  %1419 = vmatpush.msra.mxu0 %v1240
  %1420 = vmatmul.f32.gmra.mxu0 %v1079
  %v1421 = vpop.f32.mrf.mxu0
  %v1422 = vadd.f32 %v1402, %v1421
  %1423 = vdwg.mxu0
  %1424 = vmatpush.msra.mxu0 %v1271
  %1425 = vmatpush.msra.mxu0 %v1270
  %1426 = vmatpush.msra.mxu0 %v1269
  %1427 = vmatpush.msra.mxu0 %v1268
  %1428 = vmatpush.msra.mxu0 %v1267
  %1429 = vmatpush.msra.mxu0 %v1266
  %1430 = vmatpush.msra.mxu0 %v1265
  %1431 = vmatpush.msra.mxu0 %v1264
  %1432 = vmatpush.msra.mxu0 %v1263
  %1433 = vmatpush.msra.mxu0 %v1262
  %1434 = vmatpush.msra.mxu0 %v1261
  %1435 = vmatpush.msra.mxu0 %v1260
  %1436 = vmatpush.msra.mxu0 %v1259
  %1437 = vmatpush.msra.mxu0 %v1258
  %1438 = vmatpush.msra.mxu0 %v1257
  %1439 = vmatpush.msra.mxu0 %v1256
  %1440 = vmatmul.f32.gmra.mxu0 %v1105
  %v1441 = vpop.f32.mrf.mxu0
  %v1442 = vadd.f32 %v1422, %v1441
  %1443 = vdwg.mxu0
  %1444 = vmatpush.msra.mxu0 %v1287
  %1445 = vmatpush.msra.mxu0 %v1286
  %1446 = vmatpush.msra.mxu0 %v1285
  %1447 = vmatpush.msra.mxu0 %v1284
  %1448 = vmatpush.msra.mxu0 %v1283
  %1449 = vmatpush.msra.mxu0 %v1282
  %1450 = vmatpush.msra.mxu0 %v1281
  %1451 = vmatpush.msra.mxu0 %v1280
  %1452 = vmatpush.msra.mxu0 %v1279
  %1453 = vmatpush.msra.mxu0 %v1278
  %1454 = vmatpush.msra.mxu0 %v1277
  %1455 = vmatpush.msra.mxu0 %v1276
  %1456 = vmatpush.msra.mxu0 %v1275
  %1457 = vmatpush.msra.mxu0 %v1274
  %1458 = vmatpush.msra.mxu0 %v1273
  %1459 = vmatpush.msra.mxu0 %v1272
  %1460 = vmatmul.f32.gmra.mxu0 %v1131
  %v1461 = vpop.f32.mrf.mxu0
  %v1462 = vadd.f32 %v1442, %v1461
  %1463 = vdwg.mxu0
  %1464 = vmatpush.msra.mxu0 %v1303
  %1465 = vmatpush.msra.mxu0 %v1302
  %1466 = vmatpush.msra.mxu0 %v1301
  %1467 = vmatpush.msra.mxu0 %v1300
  %1468 = vmatpush.msra.mxu0 %v1299
  %1469 = vmatpush.msra.mxu0 %v1298
  %1470 = vmatpush.msra.mxu0 %v1297
  %1471 = vmatpush.msra.mxu0 %v1296
  %1472 = vmatpush.msra.mxu0 %v1295
  %1473 = vmatpush.msra.mxu0 %v1294
  %1474 = vmatpush.msra.mxu0 %v1293
  %1475 = vmatpush.msra.mxu0 %v1292
  %1476 = vmatpush.msra.mxu0 %v1291
  %1477 = vmatpush.msra.mxu0 %v1290
  %1478 = vmatpush.msra.mxu0 %v1289
  %1479 = vmatpush.msra.mxu0 %v1288
  %1480 = vmatmul.f32.gmra.mxu0 %v1157
  %v1481 = vpop.f32.mrf.mxu0
  %v1482 = vadd.f32 %v1462, %v1481
  %1483 = vdwg.mxu0
  %v1484 = vmul.f32 %v949, %v949
  %v1485 = vmul.f32 %v975, %v975
  %v1486 = vmul.f32 %v1001, %v1001
  %v1487 = vmul.f32 %v1027, %v1027
  %v1488 = vmul.f32 %v1053, %v1053
  %v1489 = vmul.f32 %v1079, %v1079
  %v1490 = vmul.f32 %v1105, %v1105
  %v1491 = vmul.f32 %v1131, %v1131
  %v1492 = vmul.f32 %v1157, %v1157
  %1493 = vmatpush.msra.mxu0 %v1175
  %1494 = vmatpush.msra.mxu0 %v1174
  %1495 = vmatpush.msra.mxu0 %v1173
  %1496 = vmatpush.msra.mxu0 %v1172
  %1497 = vmatpush.msra.mxu0 %v1171
  %1498 = vmatpush.msra.mxu0 %v1170
  %1499 = vmatpush.msra.mxu0 %v1169
  %1500 = vmatpush.msra.mxu0 %v1168
  %1501 = vmatpush.msra.mxu0 %v1167
  %1502 = vmatpush.msra.mxu0 %v1166
  %1503 = vmatpush.msra.mxu0 %v1165
  %1504 = vmatpush.msra.mxu0 %v1164
  %1505 = vmatpush.msra.mxu0 %v1163
  %1506 = vmatpush.msra.mxu0 %v1162
  %1507 = vmatpush.msra.mxu0 %v1161
  %1508 = vmatpush.msra.mxu0 %v1160
  %1509 = vmatmul.f32.gmra.mxu0 %v1484
  %v1510 = vpop.f32.mrf.mxu0
  %v1511 = vadd.f32 0.0, %v1510
  %1512 = vdwg.mxu0
  %1513 = vmatpush.msra.mxu0 %v1191
  %1514 = vmatpush.msra.mxu0 %v1190
  %1515 = vmatpush.msra.mxu0 %v1189
  %1516 = vmatpush.msra.mxu0 %v1188
  %1517 = vmatpush.msra.mxu0 %v1187
  %1518 = vmatpush.msra.mxu0 %v1186
  %1519 = vmatpush.msra.mxu0 %v1185
  %1520 = vmatpush.msra.mxu0 %v1184
  %1521 = vmatpush.msra.mxu0 %v1183
  %1522 = vmatpush.msra.mxu0 %v1182
  %1523 = vmatpush.msra.mxu0 %v1181
  %1524 = vmatpush.msra.mxu0 %v1180
  %1525 = vmatpush.msra.mxu0 %v1179
  %1526 = vmatpush.msra.mxu0 %v1178
  %1527 = vmatpush.msra.mxu0 %v1177
  %1528 = vmatpush.msra.mxu0 %v1176
  %1529 = vmatmul.f32.gmra.mxu0 %v1485
  %v1530 = vpop.f32.mrf.mxu0
  %v1531 = vadd.f32 %v1511, %v1530
  %1532 = vdwg.mxu0
  %1533 = vmatpush.msra.mxu0 %v1207
  %1534 = vmatpush.msra.mxu0 %v1206
  %1535 = vmatpush.msra.mxu0 %v1205
  %1536 = vmatpush.msra.mxu0 %v1204
  %1537 = vmatpush.msra.mxu0 %v1203
  %1538 = vmatpush.msra.mxu0 %v1202
  %1539 = vmatpush.msra.mxu0 %v1201
  %1540 = vmatpush.msra.mxu0 %v1200
  %1541 = vmatpush.msra.mxu0 %v1199
  %1542 = vmatpush.msra.mxu0 %v1198
  %1543 = vmatpush.msra.mxu0 %v1197
  %1544 = vmatpush.msra.mxu0 %v1196
  %1545 = vmatpush.msra.mxu0 %v1195
  %1546 = vmatpush.msra.mxu0 %v1194
  %1547 = vmatpush.msra.mxu0 %v1193
  %1548 = vmatpush.msra.mxu0 %v1192
  %1549 = vmatmul.f32.gmra.mxu0 %v1486
  %v1550 = vpop.f32.mrf.mxu0
  %v1551 = vadd.f32 %v1531, %v1550
  %1552 = vdwg.mxu0
  %1553 = vmatpush.msra.mxu0 %v1223
  %1554 = vmatpush.msra.mxu0 %v1222
  %1555 = vmatpush.msra.mxu0 %v1221
  %1556 = vmatpush.msra.mxu0 %v1220
  %1557 = vmatpush.msra.mxu0 %v1219
  %1558 = vmatpush.msra.mxu0 %v1218
  %1559 = vmatpush.msra.mxu0 %v1217
  %1560 = vmatpush.msra.mxu0 %v1216
  %1561 = vmatpush.msra.mxu0 %v1215
  %1562 = vmatpush.msra.mxu0 %v1214
  %1563 = vmatpush.msra.mxu0 %v1213
  %1564 = vmatpush.msra.mxu0 %v1212
  %1565 = vmatpush.msra.mxu0 %v1211
  %1566 = vmatpush.msra.mxu0 %v1210
  %1567 = vmatpush.msra.mxu0 %v1209
  %1568 = vmatpush.msra.mxu0 %v1208
  %1569 = vmatmul.f32.gmra.mxu0 %v1487
  %v1570 = vpop.f32.mrf.mxu0
  %v1571 = vadd.f32 %v1551, %v1570
  %1572 = vdwg.mxu0
  %1573 = vmatpush.msra.mxu0 %v1239
  %1574 = vmatpush.msra.mxu0 %v1238
  %1575 = vmatpush.msra.mxu0 %v1237
  %1576 = vmatpush.msra.mxu0 %v1236
  %1577 = vmatpush.msra.mxu0 %v1235
  %1578 = vmatpush.msra.mxu0 %v1234
  %1579 = vmatpush.msra.mxu0 %v1233
  %1580 = vmatpush.msra.mxu0 %v1232
  %1581 = vmatpush.msra.mxu0 %v1231
  %1582 = vmatpush.msra.mxu0 %v1230
  %1583 = vmatpush.msra.mxu0 %v1229
  %1584 = vmatpush.msra.mxu0 %v1228
  %1585 = vmatpush.msra.mxu0 %v1227
  %1586 = vmatpush.msra.mxu0 %v1226
  %1587 = vmatpush.msra.mxu0 %v1225
  %1588 = vmatpush.msra.mxu0 %v1224
  %1589 = vmatmul.f32.gmra.mxu0 %v1488
  %v1590 = vpop.f32.mrf.mxu0
  %v1591 = vadd.f32 %v1571, %v1590
  %1592 = vdwg.mxu0
  %1593 = vmatpush.msra.mxu0 %v1255
  %1594 = vmatpush.msra.mxu0 %v1254
  %1595 = vmatpush.msra.mxu0 %v1253
  %1596 = vmatpush.msra.mxu0 %v1252
  %1597 = vmatpush.msra.mxu0 %v1251
  %1598 = vmatpush.msra.mxu0 %v1250
  %1599 = vmatpush.msra.mxu0 %v1249
  %1600 = vmatpush.msra.mxu0 %v1248
  %1601 = vmatpush.msra.mxu0 %v1247
  %1602 = vmatpush.msra.mxu0 %v1246
  %1603 = vmatpush.msra.mxu0 %v1245
  %1604 = vmatpush.msra.mxu0 %v1244
  %1605 = vmatpush.msra.mxu0 %v1243
  %1606 = vmatpush.msra.mxu0 %v1242
  %1607 = vmatpush.msra.mxu0 %v1241
  %1608 = vmatpush.msra.mxu0 %v1240
  %1609 = vmatmul.f32.gmra.mxu0 %v1489
  %v1610 = vpop.f32.mrf.mxu0
  %v1611 = vadd.f32 %v1591, %v1610
  %1612 = vdwg.mxu0
  %1613 = vmatpush.msra.mxu0 %v1271
  %1614 = vmatpush.msra.mxu0 %v1270
  %1615 = vmatpush.msra.mxu0 %v1269
  %1616 = vmatpush.msra.mxu0 %v1268
  %1617 = vmatpush.msra.mxu0 %v1267
  %1618 = vmatpush.msra.mxu0 %v1266
  %1619 = vmatpush.msra.mxu0 %v1265
  %1620 = vmatpush.msra.mxu0 %v1264
  %1621 = vmatpush.msra.mxu0 %v1263
  %1622 = vmatpush.msra.mxu0 %v1262
  %1623 = vmatpush.msra.mxu0 %v1261
  %1624 = vmatpush.msra.mxu0 %v1260
  %1625 = vmatpush.msra.mxu0 %v1259
  %1626 = vmatpush.msra.mxu0 %v1258
  %1627 = vmatpush.msra.mxu0 %v1257
  %1628 = vmatpush.msra.mxu0 %v1256
  %1629 = vmatmul.f32.gmra.mxu0 %v1490
  %v1630 = vpop.f32.mrf.mxu0
  %v1631 = vadd.f32 %v1611, %v1630
  %1632 = vdwg.mxu0
  %1633 = vmatpush.msra.mxu0 %v1287
  %1634 = vmatpush.msra.mxu0 %v1286
  %1635 = vmatpush.msra.mxu0 %v1285
  %1636 = vmatpush.msra.mxu0 %v1284
  %1637 = vmatpush.msra.mxu0 %v1283
  %1638 = vmatpush.msra.mxu0 %v1282
  %1639 = vmatpush.msra.mxu0 %v1281
  %1640 = vmatpush.msra.mxu0 %v1280
  %1641 = vmatpush.msra.mxu0 %v1279
  %1642 = vmatpush.msra.mxu0 %v1278
  %1643 = vmatpush.msra.mxu0 %v1277
  %1644 = vmatpush.msra.mxu0 %v1276
  %1645 = vmatpush.msra.mxu0 %v1275
  %1646 = vmatpush.msra.mxu0 %v1274
  %1647 = vmatpush.msra.mxu0 %v1273
  %1648 = vmatpush.msra.mxu0 %v1272
  %1649 = vmatmul.f32.gmra.mxu0 %v1491
  %v1650 = vpop.f32.mrf.mxu0
  %v1651 = vadd.f32 %v1631, %v1650
  %1652 = vdwg.mxu0
  %1653 = vmatpush.msra.mxu0 %v1303
  %1654 = vmatpush.msra.mxu0 %v1302
  %1655 = vmatpush.msra.mxu0 %v1301
  %1656 = vmatpush.msra.mxu0 %v1300
  %1657 = vmatpush.msra.mxu0 %v1299
  %1658 = vmatpush.msra.mxu0 %v1298
  %1659 = vmatpush.msra.mxu0 %v1297
  %1660 = vmatpush.msra.mxu0 %v1296
  %1661 = vmatpush.msra.mxu0 %v1295
  %1662 = vmatpush.msra.mxu0 %v1294
  %1663 = vmatpush.msra.mxu0 %v1293
  %1664 = vmatpush.msra.mxu0 %v1292
  %1665 = vmatpush.msra.mxu0 %v1291
  %1666 = vmatpush.msra.mxu0 %v1290
  %1667 = vmatpush.msra.mxu0 %v1289
  %1668 = vmatpush.msra.mxu0 %v1288
  %1669 = vmatmul.f32.gmra.mxu0 %v1492
  %v1670 = vpop.f32.mrf.mxu0
  %v1671 = vadd.f32 %v1651, %v1670
  %1672 = vdwg.mxu0
  %vm1673 = vcmask 25600
  %v1674 = vsel %vm1673, %v1482, 0.0
  %v1675 = vrot.slane %v1674, 4
  %v1676 = vadd.f32 %v1674, %v1675
  %v1677 = vrot.slane %v1676, 2
  %v1678 = vadd.f32 %v1676, %v1677
  %v1679 = vrot.slane %v1678, 1
  %v1680 = vadd.f32 %v1678, %v1679
  %v1681 = vsel %vm1673, %v1671, 0.0
  %v1682 = vrot.slane %v1681, 4
  %v1683 = vadd.f32 %v1681, %v1682
  %v1684 = vrot.slane %v1683, 2
  %v1685 = vadd.f32 %v1683, %v1684
  %v1686 = vrot.slane %v1685, 1
  %v1687 = vadd.f32 %v1685, %v1686
  %v1688 = vmul.f32 %v1680, 0.001953125
  %v1689 = vmul.f32 %v1687, 0.001953125
  %v1690 = vmul.f32 %v1688, %v1688
  %v1691 = vsub.f32 %v1689, %v1690
  %v1692 = vmax.f32 %v1691, 0.0
  %v1693 = vld [vmem:[%s4] sm:$0x1]
  %v1694 = vadd.f32 %v1692, 1e-05
  %v1695 = vrsqrt.pop %v1694
  %v1696 = vmul.f32 %v1695, %v1694
  %v1697 = vmul.f32 %v1696, %v1695
  %v1698 = vmul.f32 0.5, %v1697
  %v1699 = vsub.f32 1.5, %v1698
  %v1700 = vmul.f32 %v1695, %v1699
  %vm1701 = vweird.f32 %v1694
  %vm1702 = vweird.f32 %v1695
  %vm1703 = vmor %vm1701, %vm1702
  %v1704 = vsel %vm1703, %v1695, %v1700
  %v1705 = vmul.f32 %v1693, %v1704
  %v1706 = vld [vmem:[%s5] sm:$0x1]
  %v1707 = vmul.f32 %v1688, %v1705
  %v1708 = vsub.f32 %v1706, %v1707
  %v1709 = vld [vmem:[%s3] sm:$0xff]
  %v1710 = vld [vmem:[%s3 + $0x8] sm:$0xff]
  %v1711 = vld [vmem:[%s3 + $0x10] sm:$0xff]
  %v1712 = vld [vmem:[%s3 + $0x18] sm:$0xff]
  %v1713 = vld [vmem:[%s3 + $0x20] sm:$0xf]
  %1719 = vst [vmem:[#allocation1] ss:$2 sm:$0xff] %v1709
  %s1720 = scalar_lea.vmem [#allocation1], 16
  %1721 = vst [vmem:[%s1720] ss:$2 sm:$0xff] %v1710
  %s1722 = scalar_lea.vmem [#allocation1], 32
  %1723 = vst [vmem:[%s1722] ss:$2 sm:$0xff] %v1711
  %s1724 = scalar_lea.vmem [#allocation1], 48
  %1725 = vst [vmem:[%s1724] ss:$2 sm:$0xff] %v1712
  %v1726 = vld.sshfl [vmem:[#allocation1] sm:$0xff pattern:$0x75316420]
  %v1727 = vld.sshfl [vmem:[#allocation1 + $0x8] sm:$0xff pattern:$0x75316420]
  %v1728 = vld.sshfl [vmem:[#allocation1 + $0x10] sm:$0xff pattern:$0x75316420]
  %v1729 = vld.sshfl [vmem:[#allocation1 + $0x18] sm:$0xff pattern:$0x75316420]
  %v1730 = vld.sshfl [vmem:[#allocation1 + $0x20] sm:$0xff pattern:$0x75316420]
  %v1731 = vld.sshfl [vmem:[#allocation1 + $0x28] sm:$0xff pattern:$0x75316420]
  %v1732 = vld.sshfl [vmem:[#allocation1 + $0x30] sm:$0xff pattern:$0x75316420]
  %v1733 = vld.sshfl [vmem:[#allocation1 + $0x38] sm:$0xff pattern:$0x75316420]
  %1734 = vst [vmem:[#allocation1] ss:$2 sm:$0xff] %v1713
  %v1735 = vld.sshfl [vmem:[#allocation1] sm:$0xff pattern:$0x75316420]
  %vm1736 = vcmask 31744
  %v1738 = vsel %vm1736, %v1705, 0
  %vm1740 = vcmask 1043456
  %v1741 = vsel %vm1740, %v1726, 0
  %v1743 = vsel %vm1740, %v1727, 0
  %v1745 = vsel %vm1740, %v1728, 0
  %v1747 = vsel %vm1740, %v1729, 0
  %v1749 = vsel %vm1740, %v1730, 0
  %v1751 = vsel %vm1740, %v1731, 0
  %v1753 = vsel %vm1740, %v1732, 0
  %v1755 = vsel %vm1740, %v1733, 0
  %v1757 = vsel %vm1740, %v1735, 0
  %1759 = vmatpush.msra.mxu0 0.0
  %1760 = vmatpush.msra.mxu0 0.0
  %1761 = vmatpush.msra.mxu0 0.0
  %1762 = vmatpush.msra.mxu0 0.0
  %1763 = vmatpush.msra.mxu0 0.0
  %1764 = vmatpush.msra.mxu0 0.0
  %1765 = vmatpush.msra.mxu0 0.0
  %1766 = vmatpush.msra.mxu0 0.0
  %1767 = vmatpush.msra.mxu0 0.0
  %1768 = vmatpush.msra.mxu0 0.0
  %1769 = vmatpush.msra.mxu0 0.0
  %1770 = vmatpush.msra.mxu0 0.0
  %1771 = vmatpush.msra.mxu0 0.0
  %1772 = vmatpush.msra.mxu0 0.0
  %1773 = vmatpush.msra.mxu0 0.0
  %1774 = vmatpush.msra.mxu0 %v1741
  %1775 = vmatmul.f32.gmra.mxu0 %v1738
  %v1776 = vpop.f32.mrf.mxu0
  %v1777 = vadd.f32 0.0, %v1776
  %1778 = vdwg.mxu0
  %1779 = vmatpush.msra.mxu0 0.0
  %1780 = vmatpush.msra.mxu0 0.0
  %1781 = vmatpush.msra.mxu0 0.0
  %1782 = vmatpush.msra.mxu0 0.0
  %1783 = vmatpush.msra.mxu0 0.0
  %1784 = vmatpush.msra.mxu0 0.0
  %1785 = vmatpush.msra.mxu0 0.0
  %1786 = vmatpush.msra.mxu0 0.0
  %1787 = vmatpush.msra.mxu0 0.0
  %1788 = vmatpush.msra.mxu0 0.0
  %1789 = vmatpush.msra.mxu0 0.0
  %1790 = vmatpush.msra.mxu0 0.0
  %1791 = vmatpush.msra.mxu0 0.0
  %1792 = vmatpush.msra.mxu0 0.0
  %1793 = vmatpush.msra.mxu0 0.0
  %1794 = vmatpush.msra.mxu0 %v1743
  %1795 = vmatmul.f32.gmra.mxu0 %v1738
  %v1796 = vpop.f32.mrf.mxu0
  %v1797 = vadd.f32 0.0, %v1796
  %1798 = vdwg.mxu0
  %1799 = vmatpush.msra.mxu0 0.0
  %1800 = vmatpush.msra.mxu0 0.0
  %1801 = vmatpush.msra.mxu0 0.0
  %1802 = vmatpush.msra.mxu0 0.0
  %1803 = vmatpush.msra.mxu0 0.0
  %1804 = vmatpush.msra.mxu0 0.0
  %1805 = vmatpush.msra.mxu0 0.0
  %1806 = vmatpush.msra.mxu0 0.0
  %1807 = vmatpush.msra.mxu0 0.0
  %1808 = vmatpush.msra.mxu0 0.0
  %1809 = vmatpush.msra.mxu0 0.0
  %1810 = vmatpush.msra.mxu0 0.0
  %1811 = vmatpush.msra.mxu0 0.0
  %1812 = vmatpush.msra.mxu0 0.0
  %1813 = vmatpush.msra.mxu0 0.0
  %1814 = vmatpush.msra.mxu0 %v1745
  %1815 = vmatmul.f32.gmra.mxu0 %v1738
  %v1816 = vpop.f32.mrf.mxu0
  %v1817 = vadd.f32 0.0, %v1816
  %1818 = vdwg.mxu0
  %1819 = vmatpush.msra.mxu0 0.0
  %1820 = vmatpush.msra.mxu0 0.0
  %1821 = vmatpush.msra.mxu0 0.0
  %1822 = vmatpush.msra.mxu0 0.0
  %1823 = vmatpush.msra.mxu0 0.0
  %1824 = vmatpush.msra.mxu0 0.0
  %1825 = vmatpush.msra.mxu0 0.0
  %1826 = vmatpush.msra.mxu0 0.0
  %1827 = vmatpush.msra.mxu0 0.0
  %1828 = vmatpush.msra.mxu0 0.0
  %1829 = vmatpush.msra.mxu0 0.0
  %1830 = vmatpush.msra.mxu0 0.0
  %1831 = vmatpush.msra.mxu0 0.0
  %1832 = vmatpush.msra.mxu0 0.0
  %1833 = vmatpush.msra.mxu0 0.0
  %1834 = vmatpush.msra.mxu0 %v1747
  %1835 = vmatmul.f32.gmra.mxu0 %v1738
  %v1836 = vpop.f32.mrf.mxu0
  %v1837 = vadd.f32 0.0, %v1836
  %1838 = vdwg.mxu0
  %1839 = vmatpush.msra.mxu0 0.0
  %1840 = vmatpush.msra.mxu0 0.0
  %1841 = vmatpush.msra.mxu0 0.0
  %1842 = vmatpush.msra.mxu0 0.0
  %1843 = vmatpush.msra.mxu0 0.0
  %1844 = vmatpush.msra.mxu0 0.0
  %1845 = vmatpush.msra.mxu0 0.0
  %1846 = vmatpush.msra.mxu0 0.0
  %1847 = vmatpush.msra.mxu0 0.0
  %1848 = vmatpush.msra.mxu0 0.0
  %1849 = vmatpush.msra.mxu0 0.0
  %1850 = vmatpush.msra.mxu0 0.0
  %1851 = vmatpush.msra.mxu0 0.0
  %1852 = vmatpush.msra.mxu0 0.0
  %1853 = vmatpush.msra.mxu0 0.0
  %1854 = vmatpush.msra.mxu0 %v1749
  %1855 = vmatmul.f32.gmra.mxu0 %v1738
  %v1856 = vpop.f32.mrf.mxu0
  %v1857 = vadd.f32 0.0, %v1856
  %1858 = vdwg.mxu0
  %1859 = vmatpush.msra.mxu0 0.0
  %1860 = vmatpush.msra.mxu0 0.0
  %1861 = vmatpush.msra.mxu0 0.0
  %1862 = vmatpush.msra.mxu0 0.0
  %1863 = vmatpush.msra.mxu0 0.0
  %1864 = vmatpush.msra.mxu0 0.0
  %1865 = vmatpush.msra.mxu0 0.0
  %1866 = vmatpush.msra.mxu0 0.0
  %1867 = vmatpush.msra.mxu0 0.0
  %1868 = vmatpush.msra.mxu0 0.0
  %1869 = vmatpush.msra.mxu0 0.0
  %1870 = vmatpush.msra.mxu0 0.0
  %1871 = vmatpush.msra.mxu0 0.0
  %1872 = vmatpush.msra.mxu0 0.0
  %1873 = vmatpush.msra.mxu0 0.0
  %1874 = vmatpush.msra.mxu0 %v1751
  %1875 = vmatmul.f32.gmra.mxu0 %v1738
  %v1876 = vpop.f32.mrf.mxu0
  %v1877 = vadd.f32 0.0, %v1876
  %1878 = vdwg.mxu0
  %1879 = vmatpush.msra.mxu0 0.0
  %1880 = vmatpush.msra.mxu0 0.0
  %1881 = vmatpush.msra.mxu0 0.0
  %1882 = vmatpush.msra.mxu0 0.0
  %1883 = vmatpush.msra.mxu0 0.0
  %1884 = vmatpush.msra.mxu0 0.0
  %1885 = vmatpush.msra.mxu0 0.0
  %1886 = vmatpush.msra.mxu0 0.0
  %1887 = vmatpush.msra.mxu0 0.0
  %1888 = vmatpush.msra.mxu0 0.0
  %1889 = vmatpush.msra.mxu0 0.0
  %1890 = vmatpush.msra.mxu0 0.0
  %1891 = vmatpush.msra.mxu0 0.0
  %1892 = vmatpush.msra.mxu0 0.0
  %1893 = vmatpush.msra.mxu0 0.0
  %1894 = vmatpush.msra.mxu0 %v1753
  %1895 = vmatmul.f32.gmra.mxu0 %v1738
  %v1896 = vpop.f32.mrf.mxu0
  %v1897 = vadd.f32 0.0, %v1896
  %1898 = vdwg.mxu0
  %1899 = vmatpush.msra.mxu0 0.0
  %1900 = vmatpush.msra.mxu0 0.0
  %1901 = vmatpush.msra.mxu0 0.0
  %1902 = vmatpush.msra.mxu0 0.0
  %1903 = vmatpush.msra.mxu0 0.0
  %1904 = vmatpush.msra.mxu0 0.0
  %1905 = vmatpush.msra.mxu0 0.0
  %1906 = vmatpush.msra.mxu0 0.0
  %1907 = vmatpush.msra.mxu0 0.0
  %1908 = vmatpush.msra.mxu0 0.0
  %1909 = vmatpush.msra.mxu0 0.0
  %1910 = vmatpush.msra.mxu0 0.0
  %1911 = vmatpush.msra.mxu0 0.0
  %1912 = vmatpush.msra.mxu0 0.0
  %1913 = vmatpush.msra.mxu0 0.0
  %1914 = vmatpush.msra.mxu0 %v1755
  %1915 = vmatmul.f32.gmra.mxu0 %v1738
  %v1916 = vpop.f32.mrf.mxu0
  %v1917 = vadd.f32 0.0, %v1916
  %1918 = vdwg.mxu0
  %1919 = vmatpush.msra.mxu0 0.0
  %1920 = vmatpush.msra.mxu0 0.0
  %1921 = vmatpush.msra.mxu0 0.0
  %1922 = vmatpush.msra.mxu0 0.0
  %1923 = vmatpush.msra.mxu0 0.0
  %1924 = vmatpush.msra.mxu0 0.0
  %1925 = vmatpush.msra.mxu0 0.0
  %1926 = vmatpush.msra.mxu0 0.0
  %1927 = vmatpush.msra.mxu0 0.0
  %1928 = vmatpush.msra.mxu0 0.0
  %1929 = vmatpush.msra.mxu0 0.0
  %1930 = vmatpush.msra.mxu0 0.0
  %1931 = vmatpush.msra.mxu0 0.0
  %1932 = vmatpush.msra.mxu0 0.0
  %1933 = vmatpush.msra.mxu0 0.0
  %1934 = vmatpush.msra.mxu0 %v1757
  %1935 = vmatmul.f32.gmra.mxu0 %v1738
  %v1936 = vpop.f32.mrf.mxu0
  %v1937 = vadd.f32 0.0, %v1936
  %1938 = vdwg.mxu0
  %1939 = vst [vmem:[#allocation1] ss:$2 sm:$0xff] %v1709
  %s1940 = scalar_lea.vmem [#allocation1], 16
  %1941 = vst [vmem:[%s1940] ss:$2 sm:$0xff] %v1710
  %s1942 = scalar_lea.vmem [#allocation1], 32
  %1943 = vst [vmem:[%s1942] ss:$2 sm:$0xff] %v1711
  %s1944 = scalar_lea.vmem [#allocation1], 48
  %1945 = vst [vmem:[%s1944] ss:$2 sm:$0xff] %v1712
  %v1946 = vld.sshfl [vmem:[#allocation1] sm:$0xff pattern:$0x75316420]
  %v1947 = vld.sshfl [vmem:[#allocation1 + $0x8] sm:$0xff pattern:$0x75316420]
  %v1948 = vld.sshfl [vmem:[#allocation1 + $0x10] sm:$0xff pattern:$0x75316420]
  %v1949 = vld.sshfl [vmem:[#allocation1 + $0x18] sm:$0xff pattern:$0x75316420]
  %v1950 = vld.sshfl [vmem:[#allocation1 + $0x20] sm:$0xff pattern:$0x75316420]
  %v1951 = vld.sshfl [vmem:[#allocation1 + $0x28] sm:$0xff pattern:$0x75316420]
  %v1952 = vld.sshfl [vmem:[#allocation1 + $0x30] sm:$0xff pattern:$0x75316420]
  %v1953 = vld.sshfl [vmem:[#allocation1 + $0x38] sm:$0xff pattern:$0x75316420]
  %1954 = vst [vmem:[#allocation1] ss:$2 sm:$0xff] %v1713
  %v1955 = vld.sshfl [vmem:[#allocation1] sm:$0xff pattern:$0x75316420]
  %v1957 = vsel %vm1736, %v1708, 0
  %v1959 = vsel %vm1740, %v1946, 0
  %v1961 = vsel %vm1740, %v1947, 0
  %v1963 = vsel %vm1740, %v1948, 0
  %v1965 = vsel %vm1740, %v1949, 0
  %v1967 = vsel %vm1740, %v1950, 0
  %v1969 = vsel %vm1740, %v1951, 0
  %v1971 = vsel %vm1740, %v1952, 0
  %v1973 = vsel %vm1740, %v1953, 0
  %v1975 = vsel %vm1740, %v1955, 0
  %1977 = vmatpush.msra.mxu0 0.0
  %1978 = vmatpush.msra.mxu0 0.0
  %1979 = vmatpush.msra.mxu0 0.0
  %1980 = vmatpush.msra.mxu0 0.0
  %1981 = vmatpush.msra.mxu0 0.0
  %1982 = vmatpush.msra.mxu0 0.0
  %1983 = vmatpush.msra.mxu0 0.0
  %1984 = vmatpush.msra.mxu0 0.0
  %1985 = vmatpush.msra.mxu0 0.0
  %1986 = vmatpush.msra.mxu0 0.0
  %1987 = vmatpush.msra.mxu0 0.0
  %1988 = vmatpush.msra.mxu0 0.0
  %1989 = vmatpush.msra.mxu0 0.0
  %1990 = vmatpush.msra.mxu0 0.0
  %1991 = vmatpush.msra.mxu0 0.0
  %1992 = vmatpush.msra.mxu0 %v1959
  %1993 = vmatmul.f32.gmra.mxu0 %v1957
  %v1994 = vpop.f32.mrf.mxu0
  %v1995 = vadd.f32 0.0, %v1994
  %1996 = vdwg.mxu0
  %1997 = vmatpush.msra.mxu0 0.0
  %1998 = vmatpush.msra.mxu0 0.0
  %1999 = vmatpush.msra.mxu0 0.0
  %2000 = vmatpush.msra.mxu0 0.0
  %2001 = vmatpush.msra.mxu0 0.0
  %2002 = vmatpush.msra.mxu0 0.0
  %2003 = vmatpush.msra.mxu0 0.0
  %2004 = vmatpush.msra.mxu0 0.0
  %2005 = vmatpush.msra.mxu0 0.0
  %2006 = vmatpush.msra.mxu0 0.0
  %2007 = vmatpush.msra.mxu0 0.0
  %2008 = vmatpush.msra.mxu0 0.0
  %2009 = vmatpush.msra.mxu0 0.0
  %2010 = vmatpush.msra.mxu0 0.0
  %2011 = vmatpush.msra.mxu0 0.0
  %2012 = vmatpush.msra.mxu0 %v1961
  %2013 = vmatmul.f32.gmra.mxu0 %v1957
  %v2014 = vpop.f32.mrf.mxu0
  %v2015 = vadd.f32 0.0, %v2014
  %2016 = vdwg.mxu0
  %2017 = vmatpush.msra.mxu0 0.0
  %2018 = vmatpush.msra.mxu0 0.0
  %2019 = vmatpush.msra.mxu0 0.0
  %2020 = vmatpush.msra.mxu0 0.0
  %2021 = vmatpush.msra.mxu0 0.0
  %2022 = vmatpush.msra.mxu0 0.0
  %2023 = vmatpush.msra.mxu0 0.0
  %2024 = vmatpush.msra.mxu0 0.0
  %2025 = vmatpush.msra.mxu0 0.0
  %2026 = vmatpush.msra.mxu0 0.0
  %2027 = vmatpush.msra.mxu0 0.0
  %2028 = vmatpush.msra.mxu0 0.0
  %2029 = vmatpush.msra.mxu0 0.0
  %2030 = vmatpush.msra.mxu0 0.0
  %2031 = vmatpush.msra.mxu0 0.0
  %2032 = vmatpush.msra.mxu0 %v1963
  %2033 = vmatmul.f32.gmra.mxu0 %v1957
  %v2034 = vpop.f32.mrf.mxu0
  %v2035 = vadd.f32 0.0, %v2034
  %2036 = vdwg.mxu0
  %2037 = vmatpush.msra.mxu0 0.0
  %2038 = vmatpush.msra.mxu0 0.0
  %2039 = vmatpush.msra.mxu0 0.0
  %2040 = vmatpush.msra.mxu0 0.0
  %2041 = vmatpush.msra.mxu0 0.0
  %2042 = vmatpush.msra.mxu0 0.0
  %2043 = vmatpush.msra.mxu0 0.0
  %2044 = vmatpush.msra.mxu0 0.0
  %2045 = vmatpush.msra.mxu0 0.0
  %2046 = vmatpush.msra.mxu0 0.0
  %2047 = vmatpush.msra.mxu0 0.0
  %2048 = vmatpush.msra.mxu0 0.0
  %2049 = vmatpush.msra.mxu0 0.0
  %2050 = vmatpush.msra.mxu0 0.0
  %2051 = vmatpush.msra.mxu0 0.0
  %2052 = vmatpush.msra.mxu0 %v1965
  %2053 = vmatmul.f32.gmra.mxu0 %v1957
  %v2054 = vpop.f32.mrf.mxu0
  %v2055 = vadd.f32 0.0, %v2054
  %2056 = vdwg.mxu0
  %2057 = vmatpush.msra.mxu0 0.0
  %2058 = vmatpush.msra.mxu0 0.0
  %2059 = vmatpush.msra.mxu0 0.0
  %2060 = vmatpush.msra.mxu0 0.0
  %2061 = vmatpush.msra.mxu0 0.0
  %2062 = vmatpush.msra.mxu0 0.0
  %2063 = vmatpush.msra.mxu0 0.0
  %2064 = vmatpush.msra.mxu0 0.0
  %2065 = vmatpush.msra.mxu0 0.0
  %2066 = vmatpush.msra.mxu0 0.0
  %2067 = vmatpush.msra.mxu0 0.0
  %2068 = vmatpush.msra.mxu0 0.0
  %2069 = vmatpush.msra.mxu0 0.0
  %2070 = vmatpush.msra.mxu0 0.0
  %2071 = vmatpush.msra.mxu0 0.0
  %2072 = vmatpush.msra.mxu0 %v1967
  %2073 = vmatmul.f32.gmra.mxu0 %v1957
  %v2074 = vpop.f32.mrf.mxu0
  %v2075 = vadd.f32 0.0, %v2074
  %2076 = vdwg.mxu0
  %2077 = vmatpush.msra.mxu0 0.0
  %2078 = vmatpush.msra.mxu0 0.0
  %2079 = vmatpush.msra.mxu0 0.0
  %2080 = vmatpush.msra.mxu0 0.0
  %2081 = vmatpush.msra.mxu0 0.0
  %2082 = vmatpush.msra.mxu0 0.0
  %2083 = vmatpush.msra.mxu0 0.0
  %2084 = vmatpush.msra.mxu0 0.0
  %2085 = vmatpush.msra.mxu0 0.0
  %2086 = vmatpush.msra.mxu0 0.0
  %2087 = vmatpush.msra.mxu0 0.0
  %2088 = vmatpush.msra.mxu0 0.0
  %2089 = vmatpush.msra.mxu0 0.0
  %2090 = vmatpush.msra.mxu0 0.0
  %2091 = vmatpush.msra.mxu0 0.0
  %2092 = vmatpush.msra.mxu0 %v1969
  %2093 = vmatmul.f32.gmra.mxu0 %v1957
  %v2094 = vpop.f32.mrf.mxu0
  %v2095 = vadd.f32 0.0, %v2094
  %2096 = vdwg.mxu0
  %2097 = vmatpush.msra.mxu0 0.0
  %2098 = vmatpush.msra.mxu0 0.0
  %2099 = vmatpush.msra.mxu0 0.0
  %2100 = vmatpush.msra.mxu0 0.0
  %2101 = vmatpush.msra.mxu0 0.0
  %2102 = vmatpush.msra.mxu0 0.0
  %2103 = vmatpush.msra.mxu0 0.0
  %2104 = vmatpush.msra.mxu0 0.0
  %2105 = vmatpush.msra.mxu0 0.0
  %2106 = vmatpush.msra.mxu0 0.0
  %2107 = vmatpush.msra.mxu0 0.0
  %2108 = vmatpush.msra.mxu0 0.0
  %2109 = vmatpush.msra.mxu0 0.0
  %2110 = vmatpush.msra.mxu0 0.0
  %2111 = vmatpush.msra.mxu0 0.0
  %2112 = vmatpush.msra.mxu0 %v1971
  %2113 = vmatmul.f32.gmra.mxu0 %v1957
  %v2114 = vpop.f32.mrf.mxu0
  %v2115 = vadd.f32 0.0, %v2114
  %2116 = vdwg.mxu0
  %2117 = vmatpush.msra.mxu0 0.0
  %2118 = vmatpush.msra.mxu0 0.0
  %2119 = vmatpush.msra.mxu0 0.0
  %2120 = vmatpush.msra.mxu0 0.0
  %2121 = vmatpush.msra.mxu0 0.0
  %2122 = vmatpush.msra.mxu0 0.0
  %2123 = vmatpush.msra.mxu0 0.0
  %2124 = vmatpush.msra.mxu0 0.0
  %2125 = vmatpush.msra.mxu0 0.0
  %2126 = vmatpush.msra.mxu0 0.0
  %2127 = vmatpush.msra.mxu0 0.0
  %2128 = vmatpush.msra.mxu0 0.0
  %2129 = vmatpush.msra.mxu0 0.0
  %2130 = vmatpush.msra.mxu0 0.0
  %2131 = vmatpush.msra.mxu0 0.0
  %2132 = vmatpush.msra.mxu0 %v1973
  %2133 = vmatmul.f32.gmra.mxu0 %v1957
  %v2134 = vpop.f32.mrf.mxu0
  %v2135 = vadd.f32 0.0, %v2134
  %2136 = vdwg.mxu0
  %2137 = vmatpush.msra.mxu0 0.0
  %2138 = vmatpush.msra.mxu0 0.0
  %2139 = vmatpush.msra.mxu0 0.0
  %2140 = vmatpush.msra.mxu0 0.0
  %2141 = vmatpush.msra.mxu0 0.0
  %2142 = vmatpush.msra.mxu0 0.0
  %2143 = vmatpush.msra.mxu0 0.0
  %2144 = vmatpush.msra.mxu0 0.0
  %2145 = vmatpush.msra.mxu0 0.0
  %2146 = vmatpush.msra.mxu0 0.0
  %2147 = vmatpush.msra.mxu0 0.0
  %2148 = vmatpush.msra.mxu0 0.0
  %2149 = vmatpush.msra.mxu0 0.0
  %2150 = vmatpush.msra.mxu0 0.0
  %2151 = vmatpush.msra.mxu0 0.0
  %2152 = vmatpush.msra.mxu0 %v1975
  %2153 = vmatmul.f32.gmra.mxu0 %v1957
  %v2154 = vpop.f32.mrf.mxu0
  %v2155 = vadd.f32 0.0, %v2154
  %2156 = vdwg.mxu0
  %v2157 = vperm.slane %v1777, 0
  %v2158 = vperm.slane %v1797, 0
  %v2159 = vperm.slane %v1817, 0
  %v2160 = vperm.slane %v1837, 0
  %v2161 = vperm.slane %v1857, 0
  %v2162 = vperm.slane %v1877, 0
  %v2163 = vperm.slane %v1897, 0
  %v2164 = vperm.slane %v1917, 0
  %v2165 = vperm.slane %v1937, 0
  %v2166 = vmul.f32 %v949, %v2157
  %v2167 = vmul.f32 %v975, %v2158
  %v2168 = vmul.f32 %v1001, %v2159
  %v2169 = vmul.f32 %v1027, %v2160
  %v2170 = vmul.f32 %v1053, %v2161
  %v2171 = vmul.f32 %v1079, %v2162
  %v2172 = vmul.f32 %v1105, %v2163
  %v2173 = vmul.f32 %v1131, %v2164
  %v2174 = vmul.f32 %v1157, %v2165
  %v2175 = vperm.slane %v1995, 0
  %v2176 = vperm.slane %v2015, 0
  %v2177 = vperm.slane %v2035, 0
  %v2178 = vperm.slane %v2055, 0
  %v2179 = vperm.slane %v2075, 0
  %v2180 = vperm.slane %v2095, 0
  %v2181 = vperm.slane %v2115, 0
  %v2182 = vperm.slane %v2135, 0
  %v2183 = vperm.slane %v2155, 0
  %v2184 = vadd.f32 %v2166, %v2175
  %v2185 = vadd.f32 %v2167, %v2176
  %v2186 = vadd.f32 %v2168, %v2177
  %v2187 = vadd.f32 %v2169, %v2178
  %v2188 = vadd.f32 %v2170, %v2179
  %v2189 = vadd.f32 %v2171, %v2180
  %v2190 = vadd.f32 %v2172, %v2181
  %v2191 = vadd.f32 %v2173, %v2182
  %v2192 = vadd.f32 %v2174, %v2183
  %v2193 = vmax.f32 %v2184, 0.0
  %v2194 = vmax.f32 %v2185, 0.0
  %v2195 = vmax.f32 %v2186, 0.0
  %v2196 = vmax.f32 %v2187, 0.0
  %v2197 = vmax.f32 %v2188, 0.0
  %v2198 = vmax.f32 %v2189, 0.0
  %v2199 = vmax.f32 %v2190, 0.0
  %v2200 = vmax.f32 %v2191, 0.0
  %v2201 = vmax.f32 %v2192, 0.0
  %v2210 = vrot.slane %v2194, 6
  %v2211 = vrot.slane %v2195, 4
  %v2212 = vrot.slane %v2196, 2
  %v2213 = vrot.slane %v2198, 6
  %v2214 = vrot.slane %v2199, 4
  %v2215 = vrot.slane %v2200, 2
  %vm2216 = vcmask 1041408
  %v2217 = vsel %vm2216, %v2193, %v2210
  %vm2218 = vcmask 1045508
  %v2219 = vsel %vm2218, %v2211, %v2212
  %v2220 = vsel %vm1740, %v2217, %v2219
  %v2221 = vsel %vm2216, %v2197, %v2213
  %v2222 = vsel %vm2218, %v2214, %v2215
  %v2223 = vsel %vm1740, %v2221, %v2222
  %2226 = vst [vmem:[%s6] sm:$0xff] %v2220
  %2227 = vst [vmem:[%s6 + $0x8] sm:$0xff] %v2223
  %2228 = vst [vmem:[%s6 + $0x10] sm:$0x3] %v2201
  // Predicated region
  $region26: #{skip_con_upsamp.1} parent=0 // pred_check
    _
  $region27: #{skip_con_upsamp.1} parent=0 // pred_check_branch
    %2230 = sbr.rel (0) target = $region29
  $region28: #{skip_con_upsamp.1} parent=0 // pred_region
    _
  $region29: #{skip_con_upsamp.1} parent=0 // pred_fallthru
    _
  // Predicated region
  $region30: #{skip_con_upsamp.1} parent=0 // pred_check
    _
  $region31: #{skip_con_upsamp.1} parent=0 // pred_check_branch
    %2232 = sbr.rel (0) target = $region33
  $region32: #{skip_con_upsamp.1} parent=0 // pred_region
    _
  $region33: #{skip_con_upsamp.1} parent=0 // pred_fallthru
    _

</llo_original>
